<compile_context>
chip_gen: v7x
topology: tpu7x:2x2x1
jax: 0.10.0
libtpu: 0.0.40
codegen_flags: <defaults>
</compile_context>

<pallas_src>
import functools
import math

import jax
import jax.numpy as jnp
from jax import lax
from jax.experimental import pallas as pl
from jax.experimental.pallas import tpu as pltpu


# ----------------------------------------------------------------------------
# helpers
# ----------------------------------------------------------------------------
def _round_up(x, m):
    return ((x + m - 1) // m) * m


def _seq_tile(s, pref):
    """Largest divisor of s that is <= pref and a multiple of 8 (else s)."""
    if s <= pref:
        return s
    for t in range(pref, 7, -1):
        if s % t == 0 and t % 8 == 0:
            return t
    return s


def _heads_per_block(num_heads, head_dim):
    """Smallest head group whose packed lane width is a multiple of 128
    (falls back to all heads, i.e. the full lane dim, if that is impossible)."""
    if head_dim % 128 == 0:
        return 1
    lane = 128 // math.gcd(128, head_dim) * head_dim   # lcm(head_dim, 128)
    hpb = lane // head_dim
    if hpb <= num_heads and num_heads % hpb == 0:
        return hpb
    return num_heads


# ----------------------------------------------------------------------------
# Kernel 1: tiled dense linear layer  y = x @ W + b   (bf16 in, f32 acc)
# ----------------------------------------------------------------------------
def _linear_kernel(x_ref, w_ref, b_ref, o_ref, acc_ref):
    @pl.when(pl.program_id(2) == 0)
    def _():
        acc_ref[...] = jnp.zeros_like(acc_ref)

    acc_ref[...] += jnp.dot(x_ref[...], w_ref[...],
                            preferred_element_type=jnp.float32)

    @pl.when(pl.program_id(2) == pl.num_programs(2) - 1)
    def _():
        o_ref[...] = (acc_ref[...] + b_ref[...]).astype(o_ref.dtype)


def pallas_linear(x2d, w, b, *, out_dtype=None, bm=512, bn=512, bk=1024):
    """x2d: (M, K), w: (K, N), b: (N,) f32 -> (M, N), tiled + pipelined."""
    M, K = x2d.shape
    Kw, N = w.shape
    assert K == Kw
    out_dtype = x2d.dtype if out_dtype is None else out_dtype

    tm = M if M <= bm else bm
    tn = N if N <= bn else bn
    tk = K if K <= bk else bk
    Mp, Kp, Np = _round_up(M, tm), _round_up(K, tk), _round_up(N, tn)

    xp = x2d if (Mp == M and Kp == K) else jnp.pad(x2d, ((0, Mp - M), (0, Kp - K)))
    wp = w if (Kp == K and Np == N) else jnp.pad(w, ((0, Kp - K), (0, Np - N)))
    bp = b if Np == N else jnp.pad(b, (0, Np - N))

    out = pl.pallas_call(
        _linear_kernel,
        out_shape=jax.ShapeDtypeStruct((Mp, Np), out_dtype),
        grid=(Mp // tm, Np // tn, Kp // tk),
        in_specs=[
            pl.BlockSpec((tm, tk), lambda i, j, kk: (i, kk)),
            pl.BlockSpec((tk, tn), lambda i, j, kk: (kk, j)),
            pl.BlockSpec((1, tn), lambda i, j, kk: (0, j)),
        ],
        out_specs=pl.BlockSpec((tm, tn), lambda i, j, kk: (i, j)),
        scratch_shapes=[pltpu.VMEM((tm, tn), jnp.float32)],
        compiler_params=pltpu.CompilerParams(
            dimension_semantics=("parallel", "parallel", "arbitrary")),
    )(xp, wp, bp.reshape(1, Np).astype(jnp.float32))

    if Mp != M or Np != N:
        out = out[:M, :N]
    return out


# ----------------------------------------------------------------------------
# Kernel 2: flash-style multi-head attention.
#   q/k/v: (B, S, H*Dh) head-packed bf16; 1/sqrt(Dh) pre-folded into q.
#   grid = (B, H/heads_per_block, S/tq): all parallel.  K/V block index does
#   not depend on the q-tile axis, so each (batch, head-block) K/V slab is
#   DMA'd once and reused from VMEM across all q tiles.  The online-softmax
#   KV loop runs inside the kernel with value-carried m/l/acc (no scratch).
# ----------------------------------------------------------------------------
def _attention_kernel(q_ref, k_ref, v_ref, o_ref, *, heads_in_block, head_dim,
                      kv_len, tkv):
    tq = q_ref.shape[1]
    num_kv = kv_len // tkv

    # TODO(synk): attention mask (masked_fill(mask == 0, -9e15)) is not wired
    # into the flash kernel; only mask=None is supported.
    outs = []
    for h in range(heads_in_block):          # small static unroll (<= lane block)
        lo = h * head_dim
        qh = q_ref[0, :, pl.ds(lo, head_dim)]          # (tq, Dh) bf16

        def body(i, carry):
            m, l, acc = carry
            start = pl.multiple_of(i * tkv, tkv)
            kh = k_ref[0, pl.ds(start, tkv), pl.ds(lo, head_dim)]   # (tkv, Dh)
            vh = v_ref[0, pl.ds(start, tkv), pl.ds(lo, head_dim)]   # (tkv, Dh)

            s = lax.dot_general(qh, kh, (((1,), (1,)), ((), ())),
                                preferred_element_type=jnp.float32)  # (tq, tkv)
            m_new = jnp.maximum(m, jnp.max(s, axis=-1, keepdims=True))
            alpha = jnp.exp(m - m_new)                                # (tq, 1)
            p = jnp.exp(s - m_new)                                    # (tq, tkv)
            l_new = alpha * l + jnp.sum(p, axis=-1, keepdims=True)
            acc_new = alpha * acc + jnp.dot(p.astype(vh.dtype), vh,
                                            preferred_element_type=jnp.float32)
            return m_new, l_new, acc_new

        m0 = jnp.full((tq, 1), -jnp.inf, dtype=jnp.float32)
        l0 = jnp.zeros((tq, 1), dtype=jnp.float32)
        acc0 = jnp.zeros((tq, head_dim), dtype=jnp.float32)
        _, l, acc = lax.fori_loop(0, num_kv, body, (m0, l0, acc0))

        # Deferred softmax normalization on the (tq, Dh) accumulator.
        outs.append(acc * pl.reciprocal(l, approx=True))

    packed = outs[0] if len(outs) == 1 else jnp.concatenate(outs, axis=-1)
    o_ref[0] = packed.astype(o_ref.dtype)    # one lane-dense full-width store


def pallas_attention(q, k, v, *, num_heads, head_dim, tq_pref=512, tkv_pref=512):
    B, S, HDh = q.shape
    assert HDh == num_heads * head_dim
    hpb = _heads_per_block(num_heads, head_dim)
    n_head_blocks = num_heads // hpb
    lane_blk = hpb * head_dim
    tq = _seq_tile(S, tq_pref)
    tkv = _seq_tile(S, tkv_pref)

    kernel = functools.partial(_attention_kernel, heads_in_block=hpb,
                               head_dim=head_dim, kv_len=S, tkv=tkv)
    return pl.pallas_call(
        kernel,
        out_shape=jax.ShapeDtypeStruct((B, S, HDh), q.dtype),
        grid=(B, n_head_blocks, S // tq),
        in_specs=[
            pl.BlockSpec((1, tq, lane_blk), lambda b, h, qi: (b, qi, h)),
            # Full-sequence K/V per head block; index independent of qi =>
            # fetched once per (batch, head block) and kept resident in VMEM.
            pl.BlockSpec((1, S, lane_blk), lambda b, h, qi: (b, 0, h)),
            pl.BlockSpec((1, S, lane_blk), lambda b, h, qi: (b, 0, h)),
        ],
        out_specs=pl.BlockSpec((1, tq, lane_blk), lambda b, h, qi: (b, qi, h)),
        compiler_params=pltpu.CompilerParams(
            dimension_semantics=("parallel", "parallel", "parallel")),
    )(q, k, v)


# ----------------------------------------------------------------------------
# Module: parameter init + forward glue
# ----------------------------------------------------------------------------
class MultiHeadAttentionPallas:
    def __init__(self, input_dim, output_dim, num_heads, key):
        assert output_dim % num_heads == 0, \
            "Embedding dimension must be 0 modulo number of heads."
        self.input_dim = input_dim
        self.output_dim = output_dim
        self.num_heads = num_heads
        self.head_dim = output_dim // num_heads

        k1, k2, k3, k4 = jax.random.split(key, 4)

        # xavier_uniform on a torch Linear weight of shape (out, in)
        def xavier(k, out_f, in_f):
            bound = math.sqrt(6.0 / (in_f + out_f))
            return jax.random.uniform(k, (out_f, in_f), jnp.float32, -bound, bound)

        w_qkv = xavier(k1, 3 * output_dim, input_dim)          # (3*out, in)
        b_qkv = jax.random.uniform(k2, (3 * output_dim,), jnp.float32, 0.0, 0.1)
        w_o = xavier(k3, output_dim, output_dim)               # (out, out)
        b_o = jax.random.uniform(k4, (output_dim,), jnp.float32, 0.0, 0.1)

        # Originals kept (f32) for the pure-JAX reference.
        self.w_qkv, self.b_qkv, self.w_o, self.b_o = w_qkv, b_qkv, w_o, b_o

        # Init-time (weights-only, zero per-forward cost) re-layout:
        # PyTorch interprets the 3*out output columns as (H, 3, Dh); gather the
        # q/k/v columns so each projection directly emits head-packed (., H*Dh).
        # The 1/sqrt(d_k) scale is folded into Wq/bq; weights stored in bf16 so
        # the MXU gets native bf16 operands (accumulation stays f32 in-kernel).
        H, Dh = num_heads, self.head_dim
        w_qkv_t = w_qkv.T                                       # (in, 3*out)
        cols = w_qkv_t.reshape(input_dim, H, 3, Dh)
        bias = b_qkv.reshape(H, 3, Dh)
        scale = 1.0 / math.sqrt(Dh)
        self.w_q_t = (cols[:, :, 0, :] * scale).reshape(
            input_dim, output_dim).astype(jnp.bfloat16)
        self.w_k_t = cols[:, :, 1, :].reshape(
            input_dim, output_dim).astype(jnp.bfloat16)
        self.w_v_t = cols[:, :, 2, :].reshape(
            input_dim, output_dim).astype(jnp.bfloat16)
        self.b_q = (bias[:, 0, :] * scale).reshape(-1)          # f32 biases
        self.b_k = bias[:, 1, :].reshape(-1)
        self.b_v = bias[:, 2, :].reshape(-1)
        self.w_o_t = w_o.T.astype(jnp.bfloat16)                 # (out, out)

    def __call__(self, x, mask=None, return_attention=False):
        if mask is not None:
            # TODO(synk): mask support (masked_fill with -9e15) not implemented
            # in the Pallas flash kernel.
            raise NotImplementedError("mask is not supported by the Pallas kernel")

        B, S, D = x.shape
        H, Dh = self.num_heads, self.head_dim
        x2 = x.reshape(B * S, D).astype(jnp.bfloat16)   # single cast, reused 3x

        # Head-packed bf16 projections (Pallas tiled matmul kernels).
        q = pallas_linear(x2, self.w_q_t, self.b_q,
                          out_dtype=jnp.bfloat16).reshape(B, S, H * Dh)
        k = pallas_linear(x2, self.w_k_t, self.b_k,
                          out_dtype=jnp.bfloat16).reshape(B, S, H * Dh)
        v = pallas_linear(x2, self.w_v_t, self.b_v,
                          out_dtype=jnp.bfloat16).reshape(B, S, H * Dh)

        # Flash-style attention; output is (B, S, H*Dh) head-packed bf16.
        vals = pallas_attention(q, k, v, num_heads=H, head_dim=Dh)

        # Output projection (Pallas tiled matmul kernel), final output f32.
        o = pallas_linear(vals.reshape(B * S, H * Dh), self.w_o_t, self.b_o,
                          out_dtype=jnp.float32)
        o = o.reshape(B, S, self.output_dim)

        if return_attention:
            # The flash kernel never materializes the (B, H, S, S) attention
            # matrix; recompute it in plain JAX when explicitly requested.
            qh = q.astype(jnp.float32).reshape(B, S, H, Dh).transpose(0, 2, 1, 3)
            kh = k.astype(jnp.float32).reshape(B, S, H, Dh).transpose(0, 2, 1, 3)
            logits = jnp.einsum("bhqd,bhkd->bhqk", qh, kh)   # scale folded in q
            attn = jax.nn.softmax(logits, axis=-1)
            return o, attn
        return o


# ----------------------------------------------------------------------------
# Pure-JAX reference (mirrors the PyTorch module exactly, f32 HIGHEST)
# ----------------------------------------------------------------------------
def reference_forward(mha, x):
    B, S, _ = x.shape
    H, Dh = mha.num_heads, mha.head_dim
    hp = lax.Precision.HIGHEST
    qkv = jnp.einsum("bsi,oi->bso", x, mha.w_qkv, precision=hp) + mha.b_qkv
    qkv = qkv.reshape(B, S, H, 3 * Dh).transpose(0, 2, 1, 3)
    q, k, v = jnp.split(qkv, 3, axis=-1)
    logits = jnp.einsum("bhqd,bhkd->bhqk", q, k, precision=hp) / math.sqrt(Dh)
    attn = jax.nn.softmax(logits, axis=-1)
    vals = jnp.einsum("bhqk,bhkd->bhqd", attn, v, precision=hp)
    vals = vals.transpose(0, 2, 1, 3).reshape(B, S, mha.output_dim)
    return jnp.einsum("bso,po->bsp", vals, mha.w_o, precision=hp) + mha.b_o


if __name__ == "__main__":
    key = jax.random.PRNGKey(0)
    k_p1, k_x1, k_p2, k_x2 = jax.random.split(key, 4)

    # Tolerances account for bf16 MXU operands (weights + activations rounded
    # to bf16) and the approx EUP reciprocal in the softmax denominator.
    TOL = dict(atol=5e-2, rtol=5e-2)

    # --- small canonical shape (toy usage of the PyTorch module) -------------
    B, S, input_dim, output_dim, num_heads = 2, 8, 32, 32, 4
    mha = MultiHeadAttentionPallas(input_dim, output_dim, num_heads, k_p1)
    x = jax.random.normal(k_x1, (B, S, input_dim), dtype=jnp.float32)

    out = jax.block_until_ready(jax.jit(lambda a: mha(a))(x))
    ref = reference_forward(mha, x)
    assert out.shape == (B, S, output_dim)
    err = float(jnp.max(jnp.abs(out - ref)))
    assert jnp.allclose(out, ref, **TOL), f"small-shape mismatch, max abs err {err}"

    # --- larger shape: exercises tiling, K-padding, head-pair lane blocks ----
    B2, S2, in2, out2, heads2 = 2, 512, 768, 512, 8
    mha2 = MultiHeadAttentionPallas(in2, out2, heads2, k_p2)
    x2 = jax.random.normal(k_x2, (B2, S2, in2), dtype=jnp.float32)

    o2 = jax.block_until_ready(jax.jit(lambda a: mha2(a))(x2))
    r2 = reference_forward(mha2, x2)
    assert o2.shape == (B2, S2, out2)
    err2 = float(jnp.max(jnp.abs(o2 - r2)))
    assert jnp.allclose(o2, r2, **TOL), f"tiled-shape mismatch, max abs err {err2}"

    print("KERNEL_OK")
</pallas_src>

<mosaic_0001>
module attributes {stable_mosaic.version = 11 : i64} {
  func.func @_linear_kernel(%arg0: i32, %arg1: i32, %arg2: i32, %arg3: memref<16x32xbf16, #tpu.memory_space<vmem>>, %arg4: memref<32x32xbf16, #tpu.memory_space<vmem>>, %arg5: memref<1x32xf32, #tpu.memory_space<vmem>>, %arg6: memref<16x32xf32, #tpu.memory_space<vmem>>, %arg7: memref<16x32xf32, #tpu.memory_space<vmem>>) attributes {dimension_semantics = [#tpu.dimension_semantics<parallel>, #tpu.dimension_semantics<parallel>, #tpu.dimension_semantics<arbitrary>], iteration_bounds = array<i64: 1, 1, 1>, scalar_prefetch = 0 : i64, scratch_operands = 1 : i64, tpu.core_type = #tpu.core_type<tc>, window_params = [{transform_indices = @transform_0, window_bounds = array<i64: 16, 32>}, {transform_indices = @transform_1, window_bounds = array<i64: 32, 32>}, {transform_indices = @transform_2, window_bounds = array<i64: 1, 32>}, {transform_indices = @transform_3, window_bounds = array<i64: 16, 32>}]} {
    %c0_i32 = arith.constant 0 : i32
    %0 = arith.cmpi eq, %arg2, %c0_i32 : i32
    %1 = arith.extui %0 : i1 to i32
    %c0_i32_0 = arith.constant 0 : i32
    %2 = arith.cmpi ne, %1, %c0_i32_0 : i32
    scf.if %2 {
      %cst_10 = arith.constant 0.000000e+00 : f32
      %12 = vector.broadcast %cst_10 : f32 to vector<16x32xf32>
      %c0_11 = arith.constant 0 : index
      %c0_12 = arith.constant 0 : index
      %13 = vector.load %arg7[%c0_11, %c0_12] : memref<16x32xf32, #tpu.memory_space<vmem>>, vector<16x32xf32>
      tpu.vector_store %arg7[%c0_11, %c0_12], %12 {strides = array<i32>} : memref<16x32xf32, #tpu.memory_space<vmem>>, vector<16x32xf32>,
    } else {
    }
    %c0 = arith.constant 0 : index
    %c0_1 = arith.constant 0 : index
    %3 = vector.load %arg7[%c0, %c0_1] : memref<16x32xf32, #tpu.memory_space<vmem>>, vector<16x32xf32>
    %c0_2 = arith.constant 0 : index
    %c0_3 = arith.constant 0 : index
    %4 = vector.load %arg3[%c0_2, %c0_3] : memref<16x32xbf16, #tpu.memory_space<vmem>>, vector<16x32xbf16>
    %c0_4 = arith.constant 0 : index
    %c0_5 = arith.constant 0 : index
    %5 = vector.load %arg4[%c0_4, %c0_5] : memref<32x32xbf16, #tpu.memory_space<vmem>>, vector<32x32xbf16>
    %cst = arith.constant dense<0.000000e+00> : vector<16x32xf32>
    %6 = tpu.matmul %4, %5, %cst {dimension_numbers = #tpu.dot_dimension_numbers<[1], [0], [0], [1], [0, 0, 1, 1], [], []>} : vector<16x32xbf16>, vector<32x32xbf16>, vector<16x32xf32> -> vector<16x32xf32>
    %7 = arith.addf %3, %6 : vector<16x32xf32>
    %c0_6 = arith.constant 0 : index
    %c0_7 = arith.constant 0 : index
    %8 = vector.load %arg7[%c0_6, %c0_7] : memref<16x32xf32, #tpu.memory_space<vmem>>, vector<16x32xf32>
    tpu.vector_store %arg7[%c0_6, %c0_7], %7 {strides = array<i32>} : memref<16x32xf32, #tpu.memory_space<vmem>>, vector<16x32xf32>,
    %c0_i32_8 = arith.constant 0 : i32
    %9 = arith.cmpi eq, %arg2, %c0_i32_8 : i32
    %10 = arith.extui %9 : i1 to i32
    %c0_i32_9 = arith.constant 0 : i32
    %11 = arith.cmpi ne, %10, %c0_i32_9 : i32
    scf.if %11 {
      %c0_10 = arith.constant 0 : index
      %c0_11 = arith.constant 0 : index
      %12 = vector.load %arg7[%c0_10, %c0_11] : memref<16x32xf32, #tpu.memory_space<vmem>>, vector<16x32xf32>
      %c0_12 = arith.constant 0 : index
      %c0_13 = arith.constant 0 : index
      %13 = vector.load %arg5[%c0_12, %c0_13] : memref<1x32xf32, #tpu.memory_space<vmem>>, vector<1x32xf32>
      %14 = vector.broadcast %13 : vector<1x32xf32> to vector<16x32xf32>
      %15 = arith.addf %12, %14 : vector<16x32xf32>
      %c0_14 = arith.constant 0 : index
      %c0_15 = arith.constant 0 : index
      %16 = vector.load %arg6[%c0_14, %c0_15] : memref<16x32xf32, #tpu.memory_space<vmem>>, vector<16x32xf32>
      tpu.vector_store %arg6[%c0_14, %c0_15], %15 {strides = array<i32>} : memref<16x32xf32, #tpu.memory_space<vmem>>, vector<16x32xf32>,
    } else {
    }
    return
  }
  func.func @transform_0(%arg0: i32, %arg1: i32, %arg2: i32) -> (i32, i32) {
    %c0_i32 = arith.constant 0 : i32
    return %arg0, %arg2 : i32, i32
  }
  func.func @transform_1(%arg0: i32, %arg1: i32, %arg2: i32) -> (i32, i32) {
    %c0_i32 = arith.constant 0 : i32
    return %arg2, %arg1 : i32, i32
  }
  func.func @transform_2(%arg0: i32, %arg1: i32, %arg2: i32) -> (i32, i32) {
    %c0_i32 = arith.constant 0 : i32
    %c0_i32_0 = arith.constant 0 : i32
    return %c0_i32, %arg1 : i32, i32
  }
  func.func @transform_3(%arg0: i32, %arg1: i32, %arg2: i32) -> (i32, i32) {
    %c0_i32 = arith.constant 0 : i32
    return %arg0, %arg1 : i32, i32
  }
}

module attributes {stable_mosaic.version = 11 : i64} {
  func.func @_attention_kernel(%arg0: i32, %arg1: i32, %arg2: i32, %arg3: memref<1x8x32xbf16, #tpu.memory_space<vmem>>, %arg4: memref<1x8x32xbf16, #tpu.memory_space<vmem>>, %arg5: memref<1x8x32xbf16, #tpu.memory_space<vmem>>, %arg6: memref<1x8x32xbf16, #tpu.memory_space<vmem>>) attributes {dimension_semantics = [#tpu.dimension_semantics<parallel>, #tpu.dimension_semantics<parallel>, #tpu.dimension_semantics<parallel>], iteration_bounds = array<i64: 2, 1, 1>, scalar_prefetch = 0 : i64, scratch_operands = 0 : i64, tpu.core_type = #tpu.core_type<tc>, window_params = [{transform_indices = @transform_0, window_bounds = array<i64: 1, 8, 32>}, {transform_indices = @transform_1, window_bounds = array<i64: 1, 8, 32>}, {transform_indices = @transform_2, window_bounds = array<i64: 1, 8, 32>}, {transform_indices = @transform_3, window_bounds = array<i64: 1, 8, 32>}]} {
    %c0 = arith.constant 0 : index
    %c0_0 = arith.constant 0 : index
    %c0_1 = arith.constant 0 : index
    %0 = vector.load %arg3[%c0, %c0_0, %c0_1] : memref<1x8x32xbf16, #tpu.memory_space<vmem>>, vector<1x8x8xbf16>
    %1 = vector.shape_cast %0 : vector<1x8x8xbf16> to vector<8x8xbf16>
    %cst = arith.constant 0xFF800000 : f32
    %2 = vector.broadcast %cst : f32 to vector<8x1xf32>
    %cst_2 = arith.constant 0.000000e+00 : f32
    %3 = vector.broadcast %cst_2 : f32 to vector<8x1xf32>
    %cst_3 = arith.constant 0.000000e+00 : f32
    %4 = vector.broadcast %cst_3 : f32 to vector<8x8xf32>
    %c0_i32 = arith.constant 0 : i32
    %c8_i32 = arith.constant 8 : i32
    %5 = arith.muli %c0_i32, %c8_i32 : i32
    %6 = tpu.assume_multiple %5, 8 : i32
    %c0_4 = arith.constant 0 : index
    %7 = arith.index_cast %6 : i32 to index
    %c0_5 = arith.constant 0 : index
    %8 = vector.load %arg4[%c0_4, %7, %c0_5] : memref<1x8x32xbf16, #tpu.memory_space<vmem>>, vector<1x8x8xbf16>
    %9 = vector.shape_cast %8 : vector<1x8x8xbf16> to vector<8x8xbf16>
    %c0_6 = arith.constant 0 : index
    %10 = arith.index_cast %6 : i32 to index
    %c0_7 = arith.constant 0 : index
    %11 = vector.load %arg5[%c0_6, %10, %c0_7] : memref<1x8x32xbf16, #tpu.memory_space<vmem>>, vector<1x8x8xbf16>
    %12 = vector.shape_cast %11 : vector<1x8x8xbf16> to vector<8x8xbf16>
    %cst_8 = arith.constant dense<0.000000e+00> : vector<8x8xf32>
    %13 = tpu.matmul %1, %9, %cst_8 {dimension_numbers = #tpu.dot_dimension_numbers<[1], [1], [0], [0], [0, 0, 1, 0], [], []>} : vector<8x8xbf16>, vector<8x8xbf16>, vector<8x8xf32> -> vector<8x8xf32>
    %cst_9 = arith.constant dense<0xFF800000> : vector<8xf32>
    %14 = vector.multi_reduction <maximumf>, %13, %cst_9 [1] : vector<8x8xf32> to vector<8xf32>
    %15 = vector.shape_cast %14 : vector<8xf32> to vector<8x1xf32>
    %16 = arith.maximumf %2, %15 : vector<8x1xf32>
    %17 = arith.subf %2, %16 : vector<8x1xf32>
    %18 = math.exp %17 : vector<8x1xf32>
    %19 = vector.broadcast %16 : vector<8x1xf32> to vector<8x8xf32>
    %20 = arith.subf %13, %19 : vector<8x8xf32>
    %21 = math.exp %20 : vector<8x8xf32>
    %22 = arith.mulf %18, %3 : vector<8x1xf32>
    %cst_10 = arith.constant dense<0.000000e+00> : vector<8xf32>
    %23 = vector.multi_reduction <add>, %21, %cst_10 [1] : vector<8x8xf32> to vector<8xf32>
    %24 = vector.shape_cast %23 : vector<8xf32> to vector<8x1xf32>
    %25 = arith.addf %22, %24 : vector<8x1xf32>
    %26 = vector.broadcast %18 : vector<8x1xf32> to vector<8x8xf32>
    %27 = arith.mulf %26, %4 : vector<8x8xf32>
    %28 = arith.truncf %21 : vector<8x8xf32> to vector<8x8xbf16>
    %cst_11 = arith.constant dense<0.000000e+00> : vector<8x8xf32>
    %29 = tpu.matmul %28, %12, %cst_11 {dimension_numbers = #tpu.dot_dimension_numbers<[1], [0], [0], [1], [0, 0, 1, 1], [], []>} : vector<8x8xbf16>, vector<8x8xbf16>, vector<8x8xf32> -> vector<8x8xf32>
    %30 = arith.addf %27, %29 : vector<8x8xf32>
    %c1_i32 = arith.constant 1 : i32
    %31 = tpu.reciprocal %25 {approx = true} : vector<8x1xf32> -> vector<8x1xf32>
    %32 = vector.broadcast %31 : vector<8x1xf32> to vector<8x8xf32>
    %33 = arith.mulf %30, %32 : vector<8x8xf32>
    %c0_12 = arith.constant 0 : index
    %c0_13 = arith.constant 0 : index
    %c8 = arith.constant 8 : index
    %34 = vector.load %arg3[%c0_12, %c0_13, %c8] : memref<1x8x32xbf16, #tpu.memory_space<vmem>>, vector<1x8x8xbf16>
    %35 = vector.shape_cast %34 : vector<1x8x8xbf16> to vector<8x8xbf16>
    %cst_14 = arith.constant 0xFF800000 : f32
    %36 = vector.broadcast %cst_14 : f32 to vector<8x1xf32>
    %cst_15 = arith.constant 0.000000e+00 : f32
    %37 = vector.broadcast %cst_15 : f32 to vector<8x1xf32>
    %cst_16 = arith.constant 0.000000e+00 : f32
    %38 = vector.broadcast %cst_16 : f32 to vector<8x8xf32>
    %c0_i32_17 = arith.constant 0 : i32
    %c8_i32_18 = arith.constant 8 : i32
    %39 = arith.muli %c0_i32_17, %c8_i32_18 : i32
    %40 = tpu.assume_multiple %39, 8 : i32
    %c0_19 = arith.constant 0 : index
    %41 = arith.index_cast %40 : i32 to index
    %c8_20 = arith.constant 8 : index
    %42 = vector.load %arg4[%c0_19, %41, %c8_20] : memref<1x8x32xbf16, #tpu.memory_space<vmem>>, vector<1x8x8xbf16>
    %43 = vector.shape_cast %42 : vector<1x8x8xbf16> to vector<8x8xbf16>
    %c0_21 = arith.constant 0 : index
    %44 = arith.index_cast %40 : i32 to index
    %c8_22 = arith.constant 8 : index
    %45 = vector.load %arg5[%c0_21, %44, %c8_22] : memref<1x8x32xbf16, #tpu.memory_space<vmem>>, vector<1x8x8xbf16>
    %46 = vector.shape_cast %45 : vector<1x8x8xbf16> to vector<8x8xbf16>
    %cst_23 = arith.constant dense<0.000000e+00> : vector<8x8xf32>
    %47 = tpu.matmul %35, %43, %cst_23 {dimension_numbers = #tpu.dot_dimension_numbers<[1], [1], [0], [0], [0, 0, 1, 0], [], []>} : vector<8x8xbf16>, vector<8x8xbf16>, vector<8x8xf32> -> vector<8x8xf32>
    %cst_24 = arith.constant dense<0xFF800000> : vector<8xf32>
    %48 = vector.multi_reduction <maximumf>, %47, %cst_24 [1] : vector<8x8xf32> to vector<8xf32>
    %49 = vector.shape_cast %48 : vector<8xf32> to vector<8x1xf32>
    %50 = arith.maximumf %36, %49 : vector<8x1xf32>
    %51 = arith.subf %36, %50 : vector<8x1xf32>
    %52 = math.exp %51 : vector<8x1xf32>
    %53 = vector.broadcast %50 : vector<8x1xf32> to vector<8x8xf32>
    %54 = arith.subf %47, %53 : vector<8x8xf32>
    %55 = math.exp %54 : vector<8x8xf32>
    %56 = arith.mulf %52, %37 : vector<8x1xf32>
    %cst_25 = arith.constant dense<0.000000e+00> : vector<8xf32>
    %57 = vector.multi_reduction <add>, %55, %cst_25 [1] : vector<8x8xf32> to vector<8xf32>
    %58 = vector.shape_cast %57 : vector<8xf32> to vector<8x1xf32>
    %59 = arith.addf %56, %58 : vector<8x1xf32>
    %60 = vector.broadcast %52 : vector<8x1xf32> to vector<8x8xf32>
    %61 = arith.mulf %60, %38 : vector<8x8xf32>
    %62 = arith.truncf %55 : vector<8x8xf32> to vector<8x8xbf16>
    %cst_26 = arith.constant dense<0.000000e+00> : vector<8x8xf32>
    %63 = tpu.matmul %62, %46, %cst_26 {dimension_numbers = #tpu.dot_dimension_numbers<[1], [0], [0], [1], [0, 0, 1, 1], [], []>} : vector<8x8xbf16>, vector<8x8xbf16>, vector<8x8xf32> -> vector<8x8xf32>
    %64 = arith.addf %61, %63 : vector<8x8xf32>
    %c1_i32_27 = arith.constant 1 : i32
    %65 = tpu.reciprocal %59 {approx = true} : vector<8x1xf32> -> vector<8x1xf32>
    %66 = vector.broadcast %65 : vector<8x1xf32> to vector<8x8xf32>
    %67 = arith.mulf %64, %66 : vector<8x8xf32>
    %c0_28 = arith.constant 0 : index
    %c0_29 = arith.constant 0 : index
    %c16 = arith.constant 16 : index
    %68 = vector.load %arg3[%c0_28, %c0_29, %c16] : memref<1x8x32xbf16, #tpu.memory_space<vmem>>, vector<1x8x8xbf16>
    %69 = vector.shape_cast %68 : vector<1x8x8xbf16> to vector<8x8xbf16>
    %cst_30 = arith.constant 0xFF800000 : f32
    %70 = vector.broadcast %cst_30 : f32 to vector<8x1xf32>
    %cst_31 = arith.constant 0.000000e+00 : f32
    %71 = vector.broadcast %cst_31 : f32 to vector<8x1xf32>
    %cst_32 = arith.constant 0.000000e+00 : f32
    %72 = vector.broadcast %cst_32 : f32 to vector<8x8xf32>
    %c0_i32_33 = arith.constant 0 : i32
    %c8_i32_34 = arith.constant 8 : i32
    %73 = arith.muli %c0_i32_33, %c8_i32_34 : i32
    %74 = tpu.assume_multiple %73, 8 : i32
    %c0_35 = arith.constant 0 : index
    %75 = arith.index_cast %74 : i32 to index
    %c16_36 = arith.constant 16 : index
    %76 = vector.load %arg4[%c0_35, %75, %c16_36] : memref<1x8x32xbf16, #tpu.memory_space<vmem>>, vector<1x8x8xbf16>
    %77 = vector.shape_cast %76 : vector<1x8x8xbf16> to vector<8x8xbf16>
    %c0_37 = arith.constant 0 : index
    %78 = arith.index_cast %74 : i32 to index
    %c16_38 = arith.constant 16 : index
    %79 = vector.load %arg5[%c0_37, %78, %c16_38] : memref<1x8x32xbf16, #tpu.memory_space<vmem>>, vector<1x8x8xbf16>
    %80 = vector.shape_cast %79 : vector<1x8x8xbf16> to vector<8x8xbf16>
    %cst_39 = arith.constant dense<0.000000e+00> : vector<8x8xf32>
    %81 = tpu.matmul %69, %77, %cst_39 {dimension_numbers = #tpu.dot_dimension_numbers<[1], [1], [0], [0], [0, 0, 1, 0], [], []>} : vector<8x8xbf16>, vector<8x8xbf16>, vector<8x8xf32> -> vector<8x8xf32>
    %cst_40 = arith.constant dense<0xFF800000> : vector<8xf32>
    %82 = vector.multi_reduction <maximumf>, %81, %cst_40 [1] : vector<8x8xf32> to vector<8xf32>
    %83 = vector.shape_cast %82 : vector<8xf32> to vector<8x1xf32>
    %84 = arith.maximumf %70, %83 : vector<8x1xf32>
    %85 = arith.subf %70, %84 : vector<8x1xf32>
    %86 = math.exp %85 : vector<8x1xf32>
    %87 = vector.broadcast %84 : vector<8x1xf32> to vector<8x8xf32>
    %88 = arith.subf %81, %87 : vector<8x8xf32>
    %89 = math.exp %88 : vector<8x8xf32>
    %90 = arith.mulf %86, %71 : vector<8x1xf32>
    %cst_41 = arith.constant dense<0.000000e+00> : vector<8xf32>
    %91 = vector.multi_reduction <add>, %89, %cst_41 [1] : vector<8x8xf32> to vector<8xf32>
    %92 = vector.shape_cast %91 : vector<8xf32> to vector<8x1xf32>
    %93 = arith.addf %90, %92 : vector<8x1xf32>
    %94 = vector.broadcast %86 : vector<8x1xf32> to vector<8x8xf32>
    %95 = arith.mulf %94, %72 : vector<8x8xf32>
    %96 = arith.truncf %89 : vector<8x8xf32> to vector<8x8xbf16>
    %cst_42 = arith.constant dense<0.000000e+00> : vector<8x8xf32>
    %97 = tpu.matmul %96, %80, %cst_42 {dimension_numbers = #tpu.dot_dimension_numbers<[1], [0], [0], [1], [0, 0, 1, 1], [], []>} : vector<8x8xbf16>, vector<8x8xbf16>, vector<8x8xf32> -> vector<8x8xf32>
    %98 = arith.addf %95, %97 : vector<8x8xf32>
    %c1_i32_43 = arith.constant 1 : i32
    %99 = tpu.reciprocal %93 {approx = true} : vector<8x1xf32> -> vector<8x1xf32>
    %100 = vector.broadcast %99 : vector<8x1xf32> to vector<8x8xf32>
    %101 = arith.mulf %98, %100 : vector<8x8xf32>
    %c0_44 = arith.constant 0 : index
    %c0_45 = arith.constant 0 : index
    %c24 = arith.constant 24 : index
    %102 = vector.load %arg3[%c0_44, %c0_45, %c24] : memref<1x8x32xbf16, #tpu.memory_space<vmem>>, vector<1x8x8xbf16>
    %103 = vector.shape_cast %102 : vector<1x8x8xbf16> to vector<8x8xbf16>
    %cst_46 = arith.constant 0xFF800000 : f32
    %104 = vector.broadcast %cst_46 : f32 to vector<8x1xf32>
    %cst_47 = arith.constant 0.000000e+00 : f32
    %105 = vector.broadcast %cst_47 : f32 to vector<8x1xf32>
    %cst_48 = arith.constant 0.000000e+00 : f32
    %106 = vector.broadcast %cst_48 : f32 to vector<8x8xf32>
    %c0_i32_49 = arith.constant 0 : i32
    %c8_i32_50 = arith.constant 8 : i32
    %107 = arith.muli %c0_i32_49, %c8_i32_50 : i32
    %108 = tpu.assume_multiple %107, 8 : i32
    %c0_51 = arith.constant 0 : index
    %109 = arith.index_cast %108 : i32 to index
    %c24_52 = arith.constant 24 : index
    %110 = vector.load %arg4[%c0_51, %109, %c24_52] : memref<1x8x32xbf16, #tpu.memory_space<vmem>>, vector<1x8x8xbf16>
    %111 = vector.shape_cast %110 : vector<1x8x8xbf16> to vector<8x8xbf16>
    %c0_53 = arith.constant 0 : index
    %112 = arith.index_cast %108 : i32 to index
    %c24_54 = arith.constant 24 : index
    %113 = vector.load %arg5[%c0_53, %112, %c24_54] : memref<1x8x32xbf16, #tpu.memory_space<vmem>>, vector<1x8x8xbf16>
    %114 = vector.shape_cast %113 : vector<1x8x8xbf16> to vector<8x8xbf16>
    %cst_55 = arith.constant dense<0.000000e+00> : vector<8x8xf32>
    %115 = tpu.matmul %103, %111, %cst_55 {dimension_numbers = #tpu.dot_dimension_numbers<[1], [1], [0], [0], [0, 0, 1, 0], [], []>} : vector<8x8xbf16>, vector<8x8xbf16>, vector<8x8xf32> -> vector<8x8xf32>
    %cst_56 = arith.constant dense<0xFF800000> : vector<8xf32>
    %116 = vector.multi_reduction <maximumf>, %115, %cst_56 [1] : vector<8x8xf32> to vector<8xf32>
    %117 = vector.shape_cast %116 : vector<8xf32> to vector<8x1xf32>
    %118 = arith.maximumf %104, %117 : vector<8x1xf32>
    %119 = arith.subf %104, %118 : vector<8x1xf32>
    %120 = math.exp %119 : vector<8x1xf32>
    %121 = vector.broadcast %118 : vector<8x1xf32> to vector<8x8xf32>
    %122 = arith.subf %115, %121 : vector<8x8xf32>
    %123 = math.exp %122 : vector<8x8xf32>
    %124 = arith.mulf %120, %105 : vector<8x1xf32>
    %cst_57 = arith.constant dense<0.000000e+00> : vector<8xf32>
    %125 = vector.multi_reduction <add>, %123, %cst_57 [1] : vector<8x8xf32> to vector<8xf32>
    %126 = vector.shape_cast %125 : vector<8xf32> to vector<8x1xf32>
    %127 = arith.addf %124, %126 : vector<8x1xf32>
    %128 = vector.broadcast %120 : vector<8x1xf32> to vector<8x8xf32>
    %129 = arith.mulf %128, %106 : vector<8x8xf32>
    %130 = arith.truncf %123 : vector<8x8xf32> to vector<8x8xbf16>
    %cst_58 = arith.constant dense<0.000000e+00> : vector<8x8xf32>
    %131 = tpu.matmul %130, %114, %cst_58 {dimension_numbers = #tpu.dot_dimension_numbers<[1], [0], [0], [1], [0, 0, 1, 1], [], []>} : vector<8x8xbf16>, vector<8x8xbf16>, vector<8x8xf32> -> vector<8x8xf32>
    %132 = arith.addf %129, %131 : vector<8x8xf32>
    %c1_i32_59 = arith.constant 1 : i32
    %133 = tpu.reciprocal %127 {approx = true} : vector<8x1xf32> -> vector<8x1xf32>
    %134 = vector.broadcast %133 : vector<8x1xf32> to vector<8x8xf32>
    %135 = arith.mulf %132, %134 : vector<8x8xf32>
    %136 = tpu.concatenate %33, %67, %101, %135 in 1 : vector<8x8xf32>, vector<8x8xf32>, vector<8x8xf32>, vector<8x8xf32> -> vector<8x32xf32>
    %137 = arith.truncf %136 : vector<8x32xf32> to vector<8x32xbf16>
    %c0_60 = arith.constant 0 : index
    %c0_61 = arith.constant 0 : index
    %c0_62 = arith.constant 0 : index
    %138 = vector.load %arg6[%c0_60, %c0_61, %c0_62] : memref<1x8x32xbf16, #tpu.memory_space<vmem>>, vector<1x8x32xbf16>
    %139 = vector.shape_cast %138 : vector<1x8x32xbf16> to vector<8x32xbf16>
    %140 = vector.shape_cast %137 : vector<8x32xbf16> to vector<1x8x32xbf16>
    tpu.vector_store %arg6[%c0_60, %c0_61, %c0_62], %140 {strides = array<i32>} : memref<1x8x32xbf16, #tpu.memory_space<vmem>>, vector<1x8x32xbf16>,
    return
  }
  func.func @transform_0(%arg0: i32, %arg1: i32, %arg2: i32) -> (i32, i32, i32) {
    %c0_i32 = arith.constant 0 : i32
    return %arg0, %arg2, %arg1 : i32, i32, i32
  }
  func.func @transform_1(%arg0: i32, %arg1: i32, %arg2: i32) -> (i32, i32, i32) {
    %c0_i32 = arith.constant 0 : i32
    %c0_i32_0 = arith.constant 0 : i32
    return %arg0, %c0_i32, %arg1 : i32, i32, i32
  }
  func.func @transform_2(%arg0: i32, %arg1: i32, %arg2: i32) -> (i32, i32, i32) {
    %c0_i32 = arith.constant 0 : i32
    %c0_i32_0 = arith.constant 0 : i32
    return %arg0, %c0_i32, %arg1 : i32, i32, i32
  }
  func.func @transform_3(%arg0: i32, %arg1: i32, %arg2: i32) -> (i32, i32, i32) {
    %c0_i32 = arith.constant 0 : i32
    return %arg0, %arg2, %arg1 : i32, i32, i32
  }
}

module attributes {stable_mosaic.version = 11 : i64} {
  func.func @_linear_kernel(%arg0: i32, %arg1: i32, %arg2: i32, %arg3: memref<16x32xbf16, #tpu.memory_space<vmem>>, %arg4: memref<32x32xbf16, #tpu.memory_space<vmem>>, %arg5: memref<1x32xf32, #tpu.memory_space<vmem>>, %arg6: memref<16x32xbf16, #tpu.memory_space<vmem>>, %arg7: memref<16x32xf32, #tpu.memory_space<vmem>>) attributes {dimension_semantics = [#tpu.dimension_semantics<parallel>, #tpu.dimension_semantics<parallel>, #tpu.dimension_semantics<arbitrary>], iteration_bounds = array<i64: 1, 1, 1>, scalar_prefetch = 0 : i64, scratch_operands = 1 : i64, tpu.core_type = #tpu.core_type<tc>, window_params = [{transform_indices = @transform_0, window_bounds = array<i64: 16, 32>}, {transform_indices = @transform_1, window_bounds = array<i64: 32, 32>}, {transform_indices = @transform_2, window_bounds = array<i64: 1, 32>}, {transform_indices = @transform_3, window_bounds = array<i64: 16, 32>}]} {
    %c0_i32 = arith.constant 0 : i32
    %0 = arith.cmpi eq, %arg2, %c0_i32 : i32
    %1 = arith.extui %0 : i1 to i32
    %c0_i32_0 = arith.constant 0 : i32
    %2 = arith.cmpi ne, %1, %c0_i32_0 : i32
    scf.if %2 {
      %cst_10 = arith.constant 0.000000e+00 : f32
      %12 = vector.broadcast %cst_10 : f32 to vector<16x32xf32>
      %c0_11 = arith.constant 0 : index
      %c0_12 = arith.constant 0 : index
      %13 = vector.load %arg7[%c0_11, %c0_12] : memref<16x32xf32, #tpu.memory_space<vmem>>, vector<16x32xf32>
      tpu.vector_store %arg7[%c0_11, %c0_12], %12 {strides = array<i32>} : memref<16x32xf32, #tpu.memory_space<vmem>>, vector<16x32xf32>,
    } else {
    }
    %c0 = arith.constant 0 : index
    %c0_1 = arith.constant 0 : index
    %3 = vector.load %arg7[%c0, %c0_1] : memref<16x32xf32, #tpu.memory_space<vmem>>, vector<16x32xf32>
    %c0_2 = arith.constant 0 : index
    %c0_3 = arith.constant 0 : index
    %4 = vector.load %arg3[%c0_2, %c0_3] : memref<16x32xbf16, #tpu.memory_space<vmem>>, vector<16x32xbf16>
    %c0_4 = arith.constant 0 : index
    %c0_5 = arith.constant 0 : index
    %5 = vector.load %arg4[%c0_4, %c0_5] : memref<32x32xbf16, #tpu.memory_space<vmem>>, vector<32x32xbf16>
    %cst = arith.constant dense<0.000000e+00> : vector<16x32xf32>
    %6 = tpu.matmul %4, %5, %cst {dimension_numbers = #tpu.dot_dimension_numbers<[1], [0], [0], [1], [0, 0, 1, 1], [], []>} : vector<16x32xbf16>, vector<32x32xbf16>, vector<16x32xf32> -> vector<16x32xf32>
    %7 = arith.addf %3, %6 : vector<16x32xf32>
    %c0_6 = arith.constant 0 : index
    %c0_7 = arith.constant 0 : index
    %8 = vector.load %arg7[%c0_6, %c0_7] : memref<16x32xf32, #tpu.memory_space<vmem>>, vector<16x32xf32>
    tpu.vector_store %arg7[%c0_6, %c0_7], %7 {strides = array<i32>} : memref<16x32xf32, #tpu.memory_space<vmem>>, vector<16x32xf32>,
    %c0_i32_8 = arith.constant 0 : i32
    %9 = arith.cmpi eq, %arg2, %c0_i32_8 : i32
    %10 = arith.extui %9 : i1 to i32
    %c0_i32_9 = arith.constant 0 : i32
    %11 = arith.cmpi ne, %10, %c0_i32_9 : i32
    scf.if %11 {
      %c0_10 = arith.constant 0 : index
      %c0_11 = arith.constant 0 : index
      %12 = vector.load %arg7[%c0_10, %c0_11] : memref<16x32xf32, #tpu.memory_space<vmem>>, vector<16x32xf32>
      %c0_12 = arith.constant 0 : index
      %c0_13 = arith.constant 0 : index
      %13 = vector.load %arg5[%c0_12, %c0_13] : memref<1x32xf32, #tpu.memory_space<vmem>>, vector<1x32xf32>
      %14 = vector.broadcast %13 : vector<1x32xf32> to vector<16x32xf32>
      %15 = arith.addf %12, %14 : vector<16x32xf32>
      %16 = arith.truncf %15 : vector<16x32xf32> to vector<16x32xbf16>
      %c0_14 = arith.constant 0 : index
      %c0_15 = arith.constant 0 : index
      %17 = vector.load %arg6[%c0_14, %c0_15] : memref<16x32xbf16, #tpu.memory_space<vmem>>, vector<16x32xbf16>
      tpu.vector_store %arg6[%c0_14, %c0_15], %16 {strides = array<i32>} : memref<16x32xbf16, #tpu.memory_space<vmem>>, vector<16x32xbf16>,
    } else {
    }
    return
  }
  func.func @transform_0(%arg0: i32, %arg1: i32, %arg2: i32) -> (i32, i32) {
    %c0_i32 = arith.constant 0 : i32
    return %arg0, %arg2 : i32, i32
  }
  func.func @transform_1(%arg0: i32, %arg1: i32, %arg2: i32) -> (i32, i32) {
    %c0_i32 = arith.constant 0 : i32
    return %arg2, %arg1 : i32, i32
  }
  func.func @transform_2(%arg0: i32, %arg1: i32, %arg2: i32) -> (i32, i32) {
    %c0_i32 = arith.constant 0 : i32
    %c0_i32_0 = arith.constant 0 : i32
    return %c0_i32, %arg1 : i32, i32
  }
  func.func @transform_3(%arg0: i32, %arg1: i32, %arg2: i32) -> (i32, i32) {
    %c0_i32 = arith.constant 0 : i32
    return %arg0, %arg1 : i32, i32
  }
}

</mosaic_0001>

<llo_original>
// kernel: _lambda_.7
$region0: #{_lambda_.7}
  #allocation0 [shape = 'u32[]', space=smem, size = 0x4, offset = 0x4, fixed_abs, tag = 'smem constant byte address 0x4 - core index']
  #allocation1 [shape = 'u32[144,128]{1,0:T(1,128)}', space=vmem, size = 0x12000, scoped, tag = 'internal scratch']
  #allocation2 [shape = 'f32[16,32]{1,0:T(8,128)}', space=vmem, size = 0x2000, scoped, tag = 'scratch operand']
  %s0 = inlined_call_operand.vmem [shape: bf16[16,32], index: 0, kind: input, shape index: {}]
  %s1 = inlined_call_operand.vmem [shape: bf16[32,32], index: 1, kind: input, shape index: {}]
  %s2 = inlined_call_operand.vmem [shape: f32[1,32], index: 2, kind: input, shape index: {}]
  %s3 = inlined_call_operand.vmem [shape: bf16[16,32], index: 3, kind: output, shape index: {}]
  %s4 = sld [smem:[#allocation0]]
  $region30: #{_lambda_.7} parent=0
    _
  %s6 = ssub.s32 1, %s4
  %s7 = scalar_select 0, %s6, %s4
  // Predicated region
  $region2: #{_lambda_.7} parent=0 // pred_check
    _
  $region3: #{_lambda_.7} parent=0 // pred_check_branch
    %9 = sbr.rel (0) target = $region5
  $region4: #{_lambda_.7} parent=0 // pred_region
    _
  $region5: #{_lambda_.7} parent=0 // pred_fallthru
    _
  // Predicated region
  $region6: #{_lambda_.7} parent=0 // pred_check
    _
  $region7: #{_lambda_.7} parent=0 // pred_check_branch
    %11 = sbr.rel (0) target = $region9
  $region8: #{_lambda_.7} parent=0 // pred_region
    _
  $region9: #{_lambda_.7} parent=0 // pred_fallthru
    _
  // Predicated region
  $region10: #{_lambda_.7} parent=0 // pred_check
    _
  $region11: #{_lambda_.7} parent=0 // pred_check_branch
    %13 = sbr.rel (0) target = $region13
  $region12: #{_lambda_.7} parent=0 // pred_region
    _
  $region13: #{_lambda_.7} parent=0 // pred_fallthru
    _
  %p15 = scmp.eq.s32.totalorder 0, 0
  // Predicated region
  $region14: #{_lambda_.7} parent=0 // pred_check
    %p16 = pneg %p15
  $region15: #{_lambda_.7} parent=0 // pred_check_branch
    %18 = sbr.rel (%p16) target = $region17
  $region16: #{_lambda_.7} parent=0 // pred_region
    %vm19 = vcmask 261120
    %20 = vst.msk [vmem:[#allocation2] sm:$0xff] %vm19, 0.0
    %21 = vst.msk [vmem:[#allocation2 + $0x8] sm:$0xff] %vm19, 0.0
  $region17: #{_lambda_.7} parent=0 // pred_fallthru
    _
  %v22 = vld [vmem:[#allocation2] sm:$0xff]
  %v23 = vld [vmem:[#allocation2 + $0x8] sm:$0xff]
  %v24 = vld [vmem:[%s0] sm:$0xf]
  %v25 = vld [vmem:[%s0 + $0x4] sm:$0xf]
  %v26 = vld [vmem:[%s1] sm:$0xf]
  %v27 = vld [vmem:[%s1 + $0x4] sm:$0xf]
  %v28 = vld [vmem:[%s1 + $0x8] sm:$0xf]
  %v29 = vld [vmem:[%s1 + $0xc] sm:$0xf]
  %v32 = vunpack.c.l.b16 %v24
  %v33 = vunpack.c.l.b16 %v25
  %v34 = vpack.c.b16 %v33, %v32
  %v39 = vunpack.c.l.b16 %v26
  %v40 = vunpack.c.l.b16 %v27
  %v41 = vunpack.c.l.b16 %v28
  %v42 = vunpack.c.l.b16 %v29
  %v43 = vpack.c.b16 %v40, %v39
  %v44 = vpack.c.b16 %v42, %v41
  %vm47 = vcmask 261120
  %v49 = vsel %vm47, %v34, 0
  %51 = vmatprep.subr.bf16.mxu0 0
  %52 = vmatpush1.bf16.msra.mxu0 %v43
  %53 = vmatprep.subr.bf16.mxu0 0
  %54 = vmatpush1.bf16.msra.mxu0 %v44
  %55 = vmatprep.subr.bf16.mxu0 0
  %56 = vmatpush1.bf16.msra.mxu0 0
  %57 = vmatprep.subr.bf16.mxu0 0
  %58 = vmatpush1.bf16.msra.mxu0 0
  %59 = vmatprep.subr.bf16.mxu0 0
  %60 = vmatpush1.bf16.msra.mxu0 0
  %61 = vmatprep.subr.bf16.mxu0 0
  %62 = vmatpush1.bf16.msra.mxu0 0
  %63 = vmatprep.subr.bf16.mxu0 0
  %64 = vmatpush1.bf16.msra.mxu0 0
  %65 = vmatprep.subr.bf16.mxu0 0
  %66 = vmatpush1.bf16.msra.mxu0 0
  %67 = vmatprep.subr.bf16.mxu0 0
  %68 = vmatpush1.bf16.msra.mxu0 0
  %69 = vmatprep.subr.bf16.mxu0 0
  %70 = vmatpush1.bf16.msra.mxu0 0
  %71 = vmatprep.subr.bf16.mxu0 0
  %72 = vmatpush1.bf16.msra.mxu0 0
  %73 = vmatprep.subr.bf16.mxu0 0
  %74 = vmatpush1.bf16.msra.mxu0 0
  %75 = vmatprep.subr.bf16.mxu0 0
  %76 = vmatpush1.bf16.msra.mxu0 0
  %77 = vmatprep.subr.bf16.mxu0 0
  %78 = vmatpush1.bf16.msra.mxu0 0
  %79 = vmatprep.subr.bf16.mxu0 0
  %80 = vmatpush1.bf16.msra.mxu0 0
  %81 = vmatprep.subr.bf16.mxu0 0
  %82 = vmatpush1.bf16.msra.mxu0 0
  %83 = vmatprep.mubr.bf16.mxu0 0
  %84 = vmatmul.mubr.bf16.gmra.mrb[0].mxu0 %v49
  %v85 = vpop.f32.mrb[0].mxu0
  %v86 = vadd.f32 0.0, %v85
  %v87 = vpop.f32.mrb[0].mxu0
  %v88 = vpop.f32.mrb[0].mxu0
  %v89 = vadd.f32 0.0, %v88
  %v90 = vpop.f32.mrb[0].mxu0
  %91 = vdwg.mxu0
  %v92 = vadd.f32 %v22, %v86
  %v93 = vadd.f32 %v23, %v89
  %94 = vst.msk [vmem:[#allocation2] sm:$0xff] %vm47, %v92
  %95 = vst.msk [vmem:[#allocation2 + $0x8] sm:$0xff] %vm47, %v93
  // Predicated region
  $region18: #{_lambda_.7} parent=0 // pred_check
    %p96 = pneg %p15
  $region19: #{_lambda_.7} parent=0 // pred_check_branch
    %98 = sbr.rel (%p96) target = $region21
  $region20: #{_lambda_.7} parent=0 // pred_region
    %v99 = vld [vmem:[#allocation2] sm:$0xff]
    %v100 = vld [vmem:[#allocation2 + $0x8] sm:$0xff]
    %v101 = vld [vmem:[%s2] sm:$0x1]
    %v103 = vlaneseq
    %v104 = vshrl.u32 %v103, 7
    %v105 = vsub.s32 0, %v104
    %v106 = vrot.slane %v101, %v105
    %v108 = vadd.f32 %v99, %v106
    %v109 = vadd.f32 %v100, %v106
    %v110 = vpack.c.bf16 %v109, %v108
    %v112 = vunpack.c.l.b16 %v110
    %v113 = vunpack.c.h.b16 %v110
    %v114 = vpack.c.b16 %v112, %v112
    %v115 = vpack.c.b16 %v113, %v113
    %vm118 = vcmask 257024
    %119 = vst.msk [vmem:[%s3] sm:$0xf] %vm118, %v114
    %120 = vst.msk [vmem:[%s3 + $0x4] sm:$0xf] %vm118, %v115
  $region21: #{_lambda_.7} parent=0 // pred_fallthru
    _
  // Predicated region
  $region22: #{_lambda_.7} parent=0 // pred_check
    _
  $region23: #{_lambda_.7} parent=0 // pred_check_branch
    %122 = sbr.rel (0) target = $region25
  $region24: #{_lambda_.7} parent=0 // pred_region
    _
  $region25: #{_lambda_.7} parent=0 // pred_fallthru
    _
  // Predicated region
  $region26: #{_lambda_.7} parent=0 // pred_check
    _
  $region27: #{_lambda_.7} parent=0 // pred_check_branch
    %124 = sbr.rel (0) target = $region29
  $region28: #{_lambda_.7} parent=0 // pred_region
    _
  $region29: #{_lambda_.7} parent=0 // pred_fallthru
    _

// kernel: _lambda_.9
$region0: #{_lambda_.9}
  #allocation0 [shape = 'u32[]', space=smem, size = 0x4, offset = 0x4, fixed_abs, tag = 'smem constant byte address 0x4 - core index']
  #allocation1 [shape = 'u32[144,128]{1,0:T(1,128)}', space=vmem, size = 0x12000, scoped, tag = 'internal scratch']
  #allocation2 [shape = 'f32[16,32]{1,0:T(8,128)}', space=vmem, size = 0x2000, scoped, tag = 'scratch operand']
  %s0 = inlined_call_operand.vmem [shape: bf16[16,32], index: 0, kind: input, shape index: {}]
  %s1 = inlined_call_operand.vmem [shape: bf16[32,32], index: 1, kind: input, shape index: {}]
  %s2 = inlined_call_operand.vmem [shape: f32[1,32], index: 2, kind: input, shape index: {}]
  %s3 = inlined_call_operand.hbm [shape: f32[16,32], index: 3, kind: output, shape index: {}]
  %s4 = sld [smem:[#allocation0]]
  $region30: #{_lambda_.9} parent=0
    _
  %s6 = ssub.s32 1, %s4
  %s7 = scalar_select 0, %s6, %s4
  $region1: #{_lambda_.9} parent=0
    #allocation3 [shape = 'u8[8192]{0}', space=vmem, size = 0x2000, scoped, tag = 'output window, operand 0, single buffered']
    #allocation4 [shape = 's32[1]{0}', space=sflag, size = 0x4, scoped, tag = 'scoped memory for _lambda_.9']
    %8 = vsyncpa [#allocation4], 0
    // Predicated region
    $region2: #{_lambda_.9} parent=1 // pred_check
      _
    $region3: #{_lambda_.9} parent=1 // pred_check_branch
      %10 = sbr.rel (0) target = $region5
    $region4: #{_lambda_.9} parent=1 // pred_region
      _
    $region5: #{_lambda_.9} parent=1 // pred_fallthru
      _
    // Predicated region
    $region6: #{_lambda_.9} parent=1 // pred_check
      _
    $region7: #{_lambda_.9} parent=1 // pred_check_branch
      %12 = sbr.rel (0) target = $region9
    $region8: #{_lambda_.9} parent=1 // pred_region
      _
    $region9: #{_lambda_.9} parent=1 // pred_fallthru
      _
    // Predicated region
    $region10: #{_lambda_.9} parent=1 // pred_check
      _
    $region11: #{_lambda_.9} parent=1 // pred_check_branch
      %14 = sbr.rel (0) target = $region13
    $region12: #{_lambda_.9} parent=1 // pred_region
      _
    $region13: #{_lambda_.9} parent=1 // pred_fallthru
      _
    %p16 = scmp.eq.s32.totalorder 0, 0
    // Predicated region
    $region14: #{_lambda_.9} parent=1 // pred_check
      %p17 = pneg %p16
    $region15: #{_lambda_.9} parent=1 // pred_check_branch
      %19 = sbr.rel (%p17) target = $region17
    $region16: #{_lambda_.9} parent=1 // pred_region
      %vm20 = vcmask 261120
      %21 = vst.msk [vmem:[#allocation2] sm:$0xff] %vm20, 0.0
      %22 = vst.msk [vmem:[#allocation2 + $0x8] sm:$0xff] %vm20, 0.0
    $region17: #{_lambda_.9} parent=1 // pred_fallthru
      _
    %v23 = vld [vmem:[#allocation2] sm:$0xff]
    %v24 = vld [vmem:[#allocation2 + $0x8] sm:$0xff]
    %v25 = vld [vmem:[%s0] sm:$0xf]
    %v26 = vld [vmem:[%s0 + $0x4] sm:$0xf]
    %v27 = vld [vmem:[%s1] sm:$0xf]
    %v28 = vld [vmem:[%s1 + $0x4] sm:$0xf]
    %v29 = vld [vmem:[%s1 + $0x8] sm:$0xf]
    %v30 = vld [vmem:[%s1 + $0xc] sm:$0xf]
    %v33 = vunpack.c.l.b16 %v25
    %v34 = vunpack.c.l.b16 %v26
    %v35 = vpack.c.b16 %v34, %v33
    %v40 = vunpack.c.l.b16 %v27
    %v41 = vunpack.c.l.b16 %v28
    %v42 = vunpack.c.l.b16 %v29
    %v43 = vunpack.c.l.b16 %v30
    %v44 = vpack.c.b16 %v41, %v40
    %v45 = vpack.c.b16 %v43, %v42
    %vm48 = vcmask 261120
    %v50 = vsel %vm48, %v35, 0
    %52 = vmatprep.subr.bf16.mxu0 0
    %53 = vmatpush1.bf16.msra.mxu0 %v44
    %54 = vmatprep.subr.bf16.mxu0 0
    %55 = vmatpush1.bf16.msra.mxu0 %v45
    %56 = vmatprep.subr.bf16.mxu0 0
    %57 = vmatpush1.bf16.msra.mxu0 0
    %58 = vmatprep.subr.bf16.mxu0 0
    %59 = vmatpush1.bf16.msra.mxu0 0
    %60 = vmatprep.subr.bf16.mxu0 0
    %61 = vmatpush1.bf16.msra.mxu0 0
    %62 = vmatprep.subr.bf16.mxu0 0
    %63 = vmatpush1.bf16.msra.mxu0 0
    %64 = vmatprep.subr.bf16.mxu0 0
    %65 = vmatpush1.bf16.msra.mxu0 0
    %66 = vmatprep.subr.bf16.mxu0 0
    %67 = vmatpush1.bf16.msra.mxu0 0
    %68 = vmatprep.subr.bf16.mxu0 0
    %69 = vmatpush1.bf16.msra.mxu0 0
    %70 = vmatprep.subr.bf16.mxu0 0
    %71 = vmatpush1.bf16.msra.mxu0 0
    %72 = vmatprep.subr.bf16.mxu0 0
    %73 = vmatpush1.bf16.msra.mxu0 0
    %74 = vmatprep.subr.bf16.mxu0 0
    %75 = vmatpush1.bf16.msra.mxu0 0
    %76 = vmatprep.subr.bf16.mxu0 0
    %77 = vmatpush1.bf16.msra.mxu0 0
    %78 = vmatprep.subr.bf16.mxu0 0
    %79 = vmatpush1.bf16.msra.mxu0 0
    %80 = vmatprep.subr.bf16.mxu0 0
    %81 = vmatpush1.bf16.msra.mxu0 0
    %82 = vmatprep.subr.bf16.mxu0 0
    %83 = vmatpush1.bf16.msra.mxu0 0
    %84 = vmatprep.mubr.bf16.mxu0 0
    %85 = vmatmul.mubr.bf16.gmra.mrb[0].mxu0 %v50
    %v86 = vpop.f32.mrb[0].mxu0
    %v87 = vadd.f32 0.0, %v86
    %v88 = vpop.f32.mrb[0].mxu0
    %v89 = vpop.f32.mrb[0].mxu0
    %v90 = vadd.f32 0.0, %v89
    %v91 = vpop.f32.mrb[0].mxu0
    %92 = vdwg.mxu0
    %v93 = vadd.f32 %v23, %v87
    %v94 = vadd.f32 %v24, %v90
    %95 = vst.msk [vmem:[#allocation2] sm:$0xff] %vm48, %v93
    %96 = vst.msk [vmem:[#allocation2 + $0x8] sm:$0xff] %vm48, %v94
    // Predicated region
    $region18: #{_lambda_.9} parent=1 // pred_check
      %p97 = pneg %p16
    $region19: #{_lambda_.9} parent=1 // pred_check_branch
      %99 = sbr.rel (%p97) target = $region21
    $region20: #{_lambda_.9} parent=1 // pred_region
      %v100 = vld [vmem:[#allocation2] sm:$0xff]
      %v101 = vld [vmem:[#allocation2 + $0x8] sm:$0xff]
      %v102 = vld [vmem:[%s2] sm:$0x1]
      %v104 = vlaneseq
      %v105 = vshrl.u32 %v104, 7
      %v106 = vsub.s32 0, %v105
      %v107 = vrot.slane %v102, %v106
      %v109 = vadd.f32 %v100, %v107
      %v110 = vadd.f32 %v101, %v107
      %111 = vst.msk [vmem:[#allocation3] sm:$0xff] %vm48, %v109
      %112 = vst.msk [vmem:[#allocation3 + $0x8] sm:$0xff] %vm48, %v110
    $region21: #{_lambda_.9} parent=1 // pred_fallthru
      _
    // Predicated region
    $region22: #{_lambda_.9} parent=1 // pred_check
      _
    $region23: #{_lambda_.9} parent=1 // pred_check_branch
      %114 = sbr.rel (0) target = $region25
    $region24: #{_lambda_.9} parent=1 // pred_region
      %s116 = ssub.s32 256, 256
      %117 = vsyncadd [#allocation4], %s116
      %s118 = sshll.u32 [#allocation3], 4
      %s119 = int_to_ptr.vmem [resolvable:$true] %s118
      %124 = dma.vmem_to_hbm [thread:$0]  %s119, 256, %s3, [#allocation4], 128, 128, 8
    $region25: #{_lambda_.9} parent=1 // pred_fallthru
      _
    // Predicated region
    $region26: #{_lambda_.9} parent=1 // pred_check
      _
    $region27: #{_lambda_.9} parent=1 // pred_check_branch
      %126 = sbr.rel (0) target = $region29
    $region28: #{_lambda_.9} parent=1 // pred_region
      %127 = dma.done [#allocation4], 256
    $region29: #{_lambda_.9} parent=1 // pred_fallthru
      _
    %128 = vsyncpa [#allocation4], 1

// kernel: _lambda_.8
$region0: #{_lambda_.8}
  #allocation0 [shape = 'u32[]', space=smem, size = 0x4, offset = 0x4, fixed_abs, tag = 'smem constant byte address 0x4 - core index']
  #allocation1 [shape = 'u32[144,128]{1,0:T(1,128)}', space=vmem, size = 0x12000, scoped, tag = 'internal scratch']
  %s0 = inlined_call_operand.vmem [shape: bf16[2,8,32], index: 0, kind: input, shape index: {}]
  %s1 = inlined_call_operand.vmem [shape: bf16[2,8,32], index: 1, kind: input, shape index: {}]
  %s2 = inlined_call_operand.vmem [shape: bf16[2,8,32], index: 2, kind: input, shape index: {}]
  %s3 = inlined_call_operand.vmem [shape: bf16[2,8,32], index: 3, kind: output, shape index: {}]
  %s4 = sld [smem:[#allocation0]]
  $region45: #{_lambda_.8} parent=0
    _
  %s6 = ssub.s32 1, %s4
  %s7 = scalar_select 0, %s6, %s4
  loop: start=0, step=1, limit=4
  $region2: #{_lambda_.8} parent=0 // loop_pre_header
    _
  $region3: #{_lambda_.8} parent=0 // loop_header
    %s9 = sphi 0, %s13
    %p10 = scmp.ge.s32.totalorder %s9, 4
    %s16 = sphi 0, %s35
    %s17 = sphi 0, %s31
    %s18 = sphi 0, %s27
    %s19 = sphi 0, %s16
    %s20 = sphi 0, %s17
    %s21 = sphi 0, %s18
    %s22 = sphi 0, %s19
    %s23 = sphi 0, %s20
    %s24 = sphi 0, %s21
    %s42 = sphi 0, %s44
    %s45 = sphi 0, %s42
    %s46 = sphi 0, %s45
    %s62 = sphi 0, %s46
    %s70 = sphi 0, %s72
    %s73 = sphi 0, %s70
    %s74 = sphi 0, %s73
    %s90 = sphi 0, %s74
    %s98 = sphi 0, %s100
    %s101 = sphi 0, %s98
    %s102 = sphi 0, %s101
    %s118 = sphi 0, %s102
    %s128 = sphi 0, %s130
    %s131 = sphi 0, %s128
    %s132 = sphi 0, %s131
    %s148 = sphi 0, %s132
  $region4: #{_lambda_.8} parent=0 // loop_header_branch
    %12 = sbr.rel (%p10) target = $region8
  $region5: #{_lambda_.8} parent=0 // loop_body
    %s14 = ssub.s32 %s9, 1
    %s15 = ssub.s32 %s9, 2
    %s25 = sadd.s32 1, %s18
    %p26 = scmp.ge.s32.totalorder %s25, 1
    %s27 = scalar_select %p26, 0, %s25
    %s28 = sadd.s32 1, %s17
    %s29 = scalar_select %p26, %s28, %s17
    %p30 = scmp.ge.s32.totalorder %s29, 1
    %s31 = scalar_select %p30, 0, %s29
    %s32 = sadd.s32 1, %s16
    %s33 = scalar_select %p30, %s32, %s16
    %p34 = scmp.ge.s32.totalorder %s33, 2
    %s35 = scalar_select %p34, 0, %s33
    %s36 = ssub.s32 %s16, %s35
    %s37 = ssub.s32 %s18, %s27
    %s38 = sor.u32 %s36, %s37
    %s39 = ssub.s32 %s17, %s31
    %s40 = sor.u32 %s38, %s39
    %p41 = scmp.eq.s32.totalorder %s40, 0
    %s43 = sadd.s32 %s42, 1
    %s44 = scalar_select %p41, %s42, %s43
    %p47 = pneg %p41
    %p48 = scmp.eq.s32.totalorder %s9, 1
    %p49 = por %p47, %p48
    %p50 = scmp.ne.s32.totalorder %s42, %s45
    %p51 = scmp.eq.s32.totalorder %s9, 0
    %p52 = por %p50, %p51
    %p53 = scmp.ne.s32.totalorder %s42, %s45
    %p54 = scmp.eq.s32.totalorder %s14, 1
    %p55 = por %p53, %p54
    %p56 = scmp.ne.s32.totalorder %s45, %s46
    %p57 = scmp.eq.s32.totalorder %s14, 0
    %p58 = por %p56, %p57
    %p59 = scmp.ne.s32.totalorder %s45, %s46
    %p60 = scmp.eq.s32.totalorder %s15, 1
    %p61 = por %p59, %p60
    %p63 = scmp.ne.s32.totalorder %s46, %s62
    %p64 = scmp.eq.s32.totalorder %s15, 0
    %p65 = por %p63, %p64
    %s66 = ssub.s32 %s16, %s35
    %s67 = ssub.s32 %s17, %s31
    %s68 = sor.u32 %s66, %s67
    %p69 = scmp.eq.s32.totalorder %s68, 0
    %s71 = sadd.s32 %s70, 1
    %s72 = scalar_select %p69, %s70, %s71
    %p75 = pneg %p69
    %p76 = scmp.eq.s32.totalorder %s9, 1
    %p77 = por %p75, %p76
    %p78 = scmp.ne.s32.totalorder %s70, %s73
    %p79 = scmp.eq.s32.totalorder %s9, 0
    %p80 = por %p78, %p79
    %p81 = scmp.ne.s32.totalorder %s70, %s73
    %p82 = scmp.eq.s32.totalorder %s14, 1
    %p83 = por %p81, %p82
    %p84 = scmp.ne.s32.totalorder %s73, %s74
    %p85 = scmp.eq.s32.totalorder %s14, 0
    %p86 = por %p84, %p85
    %p87 = scmp.ne.s32.totalorder %s73, %s74
    %p88 = scmp.eq.s32.totalorder %s15, 1
    %p89 = por %p87, %p88
    %p91 = scmp.ne.s32.totalorder %s74, %s90
    %p92 = scmp.eq.s32.totalorder %s15, 0
    %p93 = por %p91, %p92
    %s94 = ssub.s32 %s16, %s35
    %s95 = ssub.s32 %s17, %s31
    %s96 = sor.u32 %s94, %s95
    %p97 = scmp.eq.s32.totalorder %s96, 0
    %s99 = sadd.s32 %s98, 1
    %s100 = scalar_select %p97, %s98, %s99
    %p103 = pneg %p97
    %p104 = scmp.eq.s32.totalorder %s9, 1
    %p105 = por %p103, %p104
    %p106 = scmp.ne.s32.totalorder %s98, %s101
    %p107 = scmp.eq.s32.totalorder %s9, 0
    %p108 = por %p106, %p107
    %p109 = scmp.ne.s32.totalorder %s98, %s101
    %p110 = scmp.eq.s32.totalorder %s14, 1
    %p111 = por %p109, %p110
    %p112 = scmp.ne.s32.totalorder %s101, %s102
    %p113 = scmp.eq.s32.totalorder %s14, 0
    %p114 = por %p112, %p113
    %p115 = scmp.ne.s32.totalorder %s101, %s102
    %p116 = scmp.eq.s32.totalorder %s15, 1
    %p117 = por %p115, %p116
    %p119 = scmp.ne.s32.totalorder %s102, %s118
    %p120 = scmp.eq.s32.totalorder %s15, 0
    %p121 = por %p119, %p120
    %s122 = ssub.s32 %s16, %s35
    %s123 = ssub.s32 %s18, %s27
    %s124 = sor.u32 %s122, %s123
    %s125 = ssub.s32 %s17, %s31
    %s126 = sor.u32 %s124, %s125
    %p127 = scmp.eq.s32.totalorder %s126, 0
    %s129 = sadd.s32 %s128, 1
    %s130 = scalar_select %p127, %s128, %s129
    %p133 = pneg %p127
    %p134 = scmp.eq.s32.totalorder %s9, 1
    %p135 = por %p133, %p134
    %p136 = scmp.ne.s32.totalorder %s128, %s131
    %p137 = scmp.eq.s32.totalorder %s9, 0
    %p138 = por %p136, %p137
    %p139 = scmp.ne.s32.totalorder %s128, %s131
    %p140 = scmp.eq.s32.totalorder %s14, 1
    %p141 = por %p139, %p140
    %p142 = scmp.ne.s32.totalorder %s131, %s132
    %p143 = scmp.eq.s32.totalorder %s14, 0
    %p144 = por %p142, %p143
    %p145 = scmp.ne.s32.totalorder %s131, %s132
    %p146 = scmp.eq.s32.totalorder %s15, 1
    %p147 = por %p145, %p146
    %p149 = scmp.ne.s32.totalorder %s132, %s148
    %p150 = scmp.eq.s32.totalorder %s15, 0
    %p151 = por %p149, %p150
    %p152 = scmp.le.s32.totalorder 1, %s9
    %p153 = scmp.lt.s32.totalorder %s9, 3
    %p154 = pnand %p152, %p153
    %p155 = pneg %p154
    // Predicated region
    $region9: #{_lambda_.8} parent=5 // pred_check
      _
    $region10: #{_lambda_.8} parent=5 // pred_check_branch
      %157 = sbr.rel (%p154) target = $region12
    $region11: #{_lambda_.8} parent=5 // pred_region
      %s158 = ssub.s32 %s9, 1
    $region12: #{_lambda_.8} parent=5 // pred_fallthru
      _
    %p159 = scmp.lt.s32.totalorder %s9, 2
    // Predicated region
    $region13: #{_lambda_.8} parent=5 // pred_check
      %p160 = pneg %p159
    $region14: #{_lambda_.8} parent=5 // pred_check_branch
      %162 = sbr.rel (%p160) target = $region16
    $region15: #{_lambda_.8} parent=5 // pred_region
      // Predicated region
      $region17: #{_lambda_.8} parent=15 // pred_check
        %p163 = pneg %p52
      $region18: #{_lambda_.8} parent=15 // pred_check_branch
        %165 = sbr.rel (%p163) target = $region20
      $region19: #{_lambda_.8} parent=15 // pred_region
        %p166 = scmp.lt.s32.totalorder %s16, 1
        %s167 = scalar_select %p166, %s16, 1
        %p168 = scmp.lt.s32.totalorder %s18, 0
        %s169 = scalar_select %p168, %s18, 0
        %p170 = scmp.lt.s32.totalorder %s17, 0
        %s171 = scalar_select %p170, %s17, 0
        %s172 = sadd.s32 %s171, %s169
        %s173 = sadd.s32 %s172, %s167
        %s174 = smul.addr %s173, 4
        %s175 = scalar_lea.vmem %s0, %s174
      $region20: #{_lambda_.8} parent=15 // pred_fallthru
        _
      // Predicated region
      $region21: #{_lambda_.8} parent=15 // pred_check
        %p176 = pneg %p80
      $region22: #{_lambda_.8} parent=15 // pred_check_branch
        %178 = sbr.rel (%p176) target = $region24
      $region23: #{_lambda_.8} parent=15 // pred_region
        %p179 = scmp.lt.s32.totalorder %s16, 1
        %s180 = scalar_select %p179, %s16, 1
        %p181 = scmp.lt.s32.totalorder %s17, 0
        %s182 = scalar_select %p181, %s17, 0
        %s183 = sadd.s32 %s182, %s180
        %s184 = smul.addr %s183, 4
        %s185 = scalar_lea.vmem %s1, %s184
      $region24: #{_lambda_.8} parent=15 // pred_fallthru
        _
      // Predicated region
      $region25: #{_lambda_.8} parent=15 // pred_check
        %p186 = pneg %p108
      $region26: #{_lambda_.8} parent=15 // pred_check_branch
        %188 = sbr.rel (%p186) target = $region28
      $region27: #{_lambda_.8} parent=15 // pred_region
        %p189 = scmp.lt.s32.totalorder %s16, 1
        %s190 = scalar_select %p189, %s16, 1
        %p191 = scmp.lt.s32.totalorder %s17, 0
        %s192 = scalar_select %p191, %s17, 0
        %s193 = sadd.s32 %s192, %s190
        %s194 = smul.addr %s193, 4
        %s195 = scalar_lea.vmem %s2, %s194
      $region28: #{_lambda_.8} parent=15 // pred_fallthru
        _
    $region16: #{_lambda_.8} parent=5 // pred_fallthru
      _
    %p196 = scmp.le.s32.totalorder 1, %s9
    %p197 = scmp.lt.s32.totalorder %s9, 3
    %p198 = pnand %p196, %p197
    %p199 = pneg %p198
    // Predicated region
    $region29: #{_lambda_.8} parent=5 // pred_check
      _
    $region30: #{_lambda_.8} parent=5 // pred_check_branch
      %201 = sbr.rel (%p198) target = $region32
    $region31: #{_lambda_.8} parent=5 // pred_region
      %s202 = ssub.s32 %s9, 1
      %p203 = scmp.lt.s32.totalorder %s19, 1
      %s204 = scalar_select %p203, %s19, 1
      %p205 = scmp.lt.s32.totalorder %s21, 0
      %s206 = scalar_select %p205, %s21, 0
      %p207 = scmp.lt.s32.totalorder %s20, 0
      %s208 = scalar_select %p207, %s20, 0
      %s209 = sadd.s32 %s208, %s206
      %s210 = sadd.s32 %s209, %s204
      %s211 = smul.addr %s210, 4
      %s212 = scalar_lea.vmem %s0, %s211
      %p213 = pneg %p58
      %p214 = pneg %p55
      %p215 = scmp.lt.s32.totalorder %s19, 1
      %s216 = scalar_select %p215, %s19, 1
      %p217 = scmp.lt.s32.totalorder %s20, 0
      %s218 = scalar_select %p217, %s20, 0
      %s219 = sadd.s32 %s218, %s216
      %s220 = smul.addr %s219, 4
      %s221 = scalar_lea.vmem %s1, %s220
      %p222 = pneg %p86
      %p223 = pneg %p83
      %p224 = scmp.lt.s32.totalorder %s19, 1
      %s225 = scalar_select %p224, %s19, 1
      %p226 = scmp.lt.s32.totalorder %s20, 0
      %s227 = scalar_select %p226, %s20, 0
      %s228 = sadd.s32 %s227, %s225
      %s229 = smul.addr %s228, 4
      %s230 = scalar_lea.vmem %s2, %s229
      %p231 = pneg %p114
      %p232 = pneg %p111
      %p233 = pneg %p144
      %p234 = pneg %p141
      %p235 = scmp.lt.s32.totalorder %s19, 1
      %s236 = scalar_select %p235, %s19, 1
      %p237 = scmp.lt.s32.totalorder %s21, 0
      %s238 = scalar_select %p237, %s21, 0
      %p239 = scmp.lt.s32.totalorder %s20, 0
      %s240 = scalar_select %p239, %s20, 0
      %s241 = sadd.s32 %s240, %s238
      %s242 = sadd.s32 %s241, %s236
      %s243 = smul.addr %s242, 4
      %s244 = scalar_lea.vmem %s3, %s243
      %p245 = scmp.lt.s32.totalorder %s19, 1
      %s246 = scalar_select %p245, %s19, 1
      %p247 = scmp.lt.s32.totalorder %s21, 0
      %s248 = scalar_select %p247, %s21, 0
      %p249 = scmp.lt.s32.totalorder %s20, 0
      %s250 = scalar_select %p249, %s20, 0
      %s251 = sadd.s32 %s250, %s248
      %s252 = sadd.s32 %s251, %s246
      %s253 = smul.addr %s252, 4
      %s254 = scalar_lea.vmem %s0, %s253
      %p255 = scmp.lt.s32.totalorder %s19, 1
      %s256 = scalar_select %p255, %s19, 1
      %p257 = scmp.lt.s32.totalorder %s20, 0
      %s258 = scalar_select %p257, %s20, 0
      %s259 = sadd.s32 %s258, %s256
      %s260 = smul.addr %s259, 4
      %s261 = scalar_lea.vmem %s1, %s260
      %p262 = scmp.lt.s32.totalorder %s19, 1
      %s263 = scalar_select %p262, %s19, 1
      %p264 = scmp.lt.s32.totalorder %s20, 0
      %s265 = scalar_select %p264, %s20, 0
      %s266 = sadd.s32 %s265, %s263
      %s267 = smul.addr %s266, 4
      %s268 = scalar_lea.vmem %s2, %s267
      %p269 = scmp.lt.s32.totalorder %s19, 1
      %s270 = scalar_select %p269, %s19, 1
      %p271 = scmp.lt.s32.totalorder %s21, 0
      %s272 = scalar_select %p271, %s21, 0
      %p273 = scmp.lt.s32.totalorder %s20, 0
      %s274 = scalar_select %p273, %s20, 0
      %s275 = sadd.s32 %s274, %s272
      %s276 = sadd.s32 %s275, %s270
      %s277 = smul.addr %s276, 4
      %s278 = scalar_lea.vmem %s3, %s277
      %v280 = vld [vmem:[%s254] sm:$0xf]
      %v281 = vld [vmem:[%s261] sm:$0xf]
      %v282 = vld [vmem:[%s268] sm:$0xf]
      %vm283 = vcmask 64512
      %v285 = vsel %vm283, %v280, 0
      %v288 = vsel %vm283, %v281, 0
      %290 = vmatprep.subr.bf16.mxu0 0
      %291 = vmatpush1.bf16.xpose.msra.mxu0 %v288
      %292 = vmatprep.subr.bf16.mxu0 0
      %293 = vmatpush1.bf16.xpose.msra.mxu0 0
      %294 = vmatprep.subr.bf16.mxu0 0
      %295 = vmatpush1.bf16.xpose.msra.mxu0 0
      %296 = vmatprep.subr.bf16.mxu0 0
      %297 = vmatpush1.bf16.xpose.msra.mxu0 0
      %298 = vmatprep.subr.bf16.mxu0 0
      %299 = vmatpush1.bf16.xpose.msra.mxu0 0
      %300 = vmatprep.subr.bf16.mxu0 0
      %301 = vmatpush1.bf16.xpose.msra.mxu0 0
      %302 = vmatprep.subr.bf16.mxu0 0
      %303 = vmatpush1.bf16.xpose.msra.mxu0 0
      %304 = vmatprep.subr.bf16.mxu0 0
      %305 = vmatpush1.bf16.xpose.msra.mxu0 0
      %306 = vmatprep.subr.bf16.mxu0 0
      %307 = vmatpush1.bf16.xpose.msra.mxu0 0
      %308 = vmatprep.subr.bf16.mxu0 0
      %309 = vmatpush1.bf16.xpose.msra.mxu0 0
      %310 = vmatprep.subr.bf16.mxu0 0
      %311 = vmatpush1.bf16.xpose.msra.mxu0 0
      %312 = vmatprep.subr.bf16.mxu0 0
      %313 = vmatpush1.bf16.xpose.msra.mxu0 0
      %314 = vmatprep.subr.bf16.mxu0 0
      %315 = vmatpush1.bf16.xpose.msra.mxu0 0
      %316 = vmatprep.subr.bf16.mxu0 0
      %317 = vmatpush1.bf16.xpose.msra.mxu0 0
      %318 = vmatprep.subr.bf16.mxu0 0
      %319 = vmatpush1.bf16.xpose.msra.mxu0 0
      %320 = vmatprep.subr.bf16.mxu0 0
      %321 = vmatpush1.bf16.xpose.msra.mxu0 0
      %322 = vmatprep.mubr.bf16.mxu0 0
      %323 = vmatmul.mubr.bf16.gmra.mrb[0].mxu0 %v285
      %v324 = vpop.f32.mrb[0].mxu0
      %v325 = vadd.f32 0.0, %v324
      %v326 = vpop.f32.mrb[0].mxu0
      %v327 = vpop.f32.mrb[0].mxu0
      %v328 = vpop.f32.mrb[0].mxu0
      %329 = vdwg.mxu0
      %v330 = vsel %vm283, %v325, -inf
      %331 = vmax.xlane.f32.xlu0 %v330
      %v332 = vpop.xlane.xlu0 %331
      %v333 = vsub.f32 -inf, %v332
      %v334 = vmul.f32 %v333, 1.442695
      %v335 = vpow.pop %v334
      %v336 = vsub.f32 %v325, %v332
      %v337 = vmul.f32 %v336, 1.442695
      %v338 = vpow.pop %v337
      %v339 = vmul.f32 %v335, 0.0
      %v340 = vsel %vm283, %v338, 0.0
      %341 = vadd.xlane.f32.xlu0 %v340
      %v342 = vpop.xlane.xlu0 %341
      %v343 = vadd.f32 %v339, %v342
      %v344 = vpack.c.bf16 %v338, %v338
      %v346 = vsel %vm283, %v344, 0
      %vm348 = vcmask 1043456
      %v350 = vsel %vm348, %v282, 0
      %352 = vmatprep.subr.bf16.mxu0 0
      %353 = vmatpush1.bf16.msra.mxu0 %v350
      %354 = vmatprep.subr.bf16.mxu0 0
      %355 = vmatpush1.bf16.msra.mxu0 0
      %356 = vmatprep.subr.bf16.mxu0 0
      %357 = vmatpush1.bf16.msra.mxu0 0
      %358 = vmatprep.subr.bf16.mxu0 0
      %359 = vmatpush1.bf16.msra.mxu0 0
      %360 = vmatprep.subr.bf16.mxu0 0
      %361 = vmatpush1.bf16.msra.mxu0 0
      %362 = vmatprep.subr.bf16.mxu0 0
      %363 = vmatpush1.bf16.msra.mxu0 0
      %364 = vmatprep.subr.bf16.mxu0 0
      %365 = vmatpush1.bf16.msra.mxu0 0
      %366 = vmatprep.subr.bf16.mxu0 0
      %367 = vmatpush1.bf16.msra.mxu0 0
      %368 = vmatprep.subr.bf16.mxu0 0
      %369 = vmatpush1.bf16.msra.mxu0 0
      %370 = vmatprep.subr.bf16.mxu0 0
      %371 = vmatpush1.bf16.msra.mxu0 0
      %372 = vmatprep.subr.bf16.mxu0 0
      %373 = vmatpush1.bf16.msra.mxu0 0
      %374 = vmatprep.subr.bf16.mxu0 0
      %375 = vmatpush1.bf16.msra.mxu0 0
      %376 = vmatprep.subr.bf16.mxu0 0
      %377 = vmatpush1.bf16.msra.mxu0 0
      %378 = vmatprep.subr.bf16.mxu0 0
      %379 = vmatpush1.bf16.msra.mxu0 0
      %380 = vmatprep.subr.bf16.mxu0 0
      %381 = vmatpush1.bf16.msra.mxu0 0
      %382 = vmatprep.subr.bf16.mxu0 0
      %383 = vmatpush1.bf16.msra.mxu0 0
      %384 = vmatprep.mubr.bf16.mxu0 0
      %385 = vmatmul.mubr.bf16.gmra.mrb[0].mxu0 %v346
      %v386 = vpop.f32.mrb[0].mxu0
      %v387 = vadd.f32 0.0, %v386
      %v388 = vpop.f32.mrb[0].mxu0
      %v389 = vpop.f32.mrb[0].mxu0
      %v390 = vpop.f32.mrb[0].mxu0
      %391 = vdwg.mxu0
      %v392 = vadd.f32 %v339, %v387
      %v393 = vrcp.pop %v343
      %v394 = vmul.f32 %v392, %v393
      %v396 = vunpack.c.l.b16 %v280
      %v397 = vpack.c.b16 %v396, %v396
      %398 = vrot.lane.b32.xlu0 %v397, 120
      %v399 = vpop.permute.xlu0 %398
      %v401 = vunpack.c.l.b16 %v281
      %v402 = vpack.c.b16 %v401, %v401
      %403 = vrot.lane.b32.xlu0 %v402, 120
      %v404 = vpop.permute.xlu0 %403
      %v406 = vsel %vm283, %v399, 0
      %v409 = vsel %vm283, %v404, 0
      %411 = vmatprep.subr.bf16.mxu0 0
      %412 = vmatpush1.bf16.xpose.msra.mxu0 %v409
      %413 = vmatprep.subr.bf16.mxu0 0
      %414 = vmatpush1.bf16.xpose.msra.mxu0 0
      %415 = vmatprep.subr.bf16.mxu0 0
      %416 = vmatpush1.bf16.xpose.msra.mxu0 0
      %417 = vmatprep.subr.bf16.mxu0 0
      %418 = vmatpush1.bf16.xpose.msra.mxu0 0
      %419 = vmatprep.subr.bf16.mxu0 0
      %420 = vmatpush1.bf16.xpose.msra.mxu0 0
      %421 = vmatprep.subr.bf16.mxu0 0
      %422 = vmatpush1.bf16.xpose.msra.mxu0 0
      %423 = vmatprep.subr.bf16.mxu0 0
      %424 = vmatpush1.bf16.xpose.msra.mxu0 0
      %425 = vmatprep.subr.bf16.mxu0 0
      %426 = vmatpush1.bf16.xpose.msra.mxu0 0
      %427 = vmatprep.subr.bf16.mxu0 0
      %428 = vmatpush1.bf16.xpose.msra.mxu0 0
      %429 = vmatprep.subr.bf16.mxu0 0
      %430 = vmatpush1.bf16.xpose.msra.mxu0 0
      %431 = vmatprep.subr.bf16.mxu0 0
      %432 = vmatpush1.bf16.xpose.msra.mxu0 0
      %433 = vmatprep.subr.bf16.mxu0 0
      %434 = vmatpush1.bf16.xpose.msra.mxu0 0
      %435 = vmatprep.subr.bf16.mxu0 0
      %436 = vmatpush1.bf16.xpose.msra.mxu0 0
      %437 = vmatprep.subr.bf16.mxu0 0
      %438 = vmatpush1.bf16.xpose.msra.mxu0 0
      %439 = vmatprep.subr.bf16.mxu0 0
      %440 = vmatpush1.bf16.xpose.msra.mxu0 0
      %441 = vmatprep.subr.bf16.mxu0 0
      %442 = vmatpush1.bf16.xpose.msra.mxu0 0
      %443 = vmatprep.mubr.bf16.mxu0 0
      %444 = vmatmul.mubr.bf16.gmra.mrb[0].mxu0 %v406
      %v445 = vpop.f32.mrb[0].mxu0
      %v446 = vadd.f32 0.0, %v445
      %v447 = vpop.f32.mrb[0].mxu0
      %v448 = vpop.f32.mrb[0].mxu0
      %v449 = vpop.f32.mrb[0].mxu0
      %450 = vdwg.mxu0
      %v451 = vsel %vm283, %v446, -inf
      %452 = vmax.xlane.f32.xlu0 %v451
      %v453 = vpop.xlane.xlu0 %452
      %v454 = vsub.f32 -inf, %v453
      %v455 = vmul.f32 %v454, 1.442695
      %v456 = vpow.pop %v455
      %v457 = vsub.f32 %v446, %v453
      %v458 = vmul.f32 %v457, 1.442695
      %v459 = vpow.pop %v458
      %v460 = vmul.f32 %v456, 0.0
      %v461 = vsel %vm283, %v459, 0.0
      %462 = vadd.xlane.f32.xlu0 %v461
      %v463 = vpop.xlane.xlu0 %462
      %v464 = vadd.f32 %v460, %v463
      %v465 = vpack.c.bf16 %v459, %v459
      %v467 = vunpack.c.l.b16 %v282
      %v468 = vpack.c.b16 %v467, %v467
      %469 = vrot.lane.b32.xlu0 %v468, 120
      %v470 = vpop.permute.xlu0 %469
      %v472 = vsel %vm283, %v465, 0
      %v475 = vsel %vm348, %v470, 0
      %477 = vmatprep.subr.bf16.mxu0 0
      %478 = vmatpush1.bf16.msra.mxu0 %v475
      %479 = vmatprep.subr.bf16.mxu0 0
      %480 = vmatpush1.bf16.msra.mxu0 0
      %481 = vmatprep.subr.bf16.mxu0 0
      %482 = vmatpush1.bf16.msra.mxu0 0
      %483 = vmatprep.subr.bf16.mxu0 0
      %484 = vmatpush1.bf16.msra.mxu0 0
      %485 = vmatprep.subr.bf16.mxu0 0
      %486 = vmatpush1.bf16.msra.mxu0 0
      %487 = vmatprep.subr.bf16.mxu0 0
      %488 = vmatpush1.bf16.msra.mxu0 0
      %489 = vmatprep.subr.bf16.mxu0 0
      %490 = vmatpush1.bf16.msra.mxu0 0
      %491 = vmatprep.subr.bf16.mxu0 0
      %492 = vmatpush1.bf16.msra.mxu0 0
      %493 = vmatprep.subr.bf16.mxu0 0
      %494 = vmatpush1.bf16.msra.mxu0 0
      %495 = vmatprep.subr.bf16.mxu0 0
      %496 = vmatpush1.bf16.msra.mxu0 0
      %497 = vmatprep.subr.bf16.mxu0 0
      %498 = vmatpush1.bf16.msra.mxu0 0
      %499 = vmatprep.subr.bf16.mxu0 0
      %500 = vmatpush1.bf16.msra.mxu0 0
      %501 = vmatprep.subr.bf16.mxu0 0
      %502 = vmatpush1.bf16.msra.mxu0 0
      %503 = vmatprep.subr.bf16.mxu0 0
      %504 = vmatpush1.bf16.msra.mxu0 0
      %505 = vmatprep.subr.bf16.mxu0 0
      %506 = vmatpush1.bf16.msra.mxu0 0
      %507 = vmatprep.subr.bf16.mxu0 0
      %508 = vmatpush1.bf16.msra.mxu0 0
      %509 = vmatprep.mubr.bf16.mxu0 0
      %510 = vmatmul.mubr.bf16.gmra.mrb[0].mxu0 %v472
      %v511 = vpop.f32.mrb[0].mxu0
      %v512 = vadd.f32 0.0, %v511
      %v513 = vpop.f32.mrb[0].mxu0
      %v514 = vpop.f32.mrb[0].mxu0
      %v515 = vpop.f32.mrb[0].mxu0
      %516 = vdwg.mxu0
      %v517 = vadd.f32 %v460, %v512
      %v518 = vrcp.pop %v464
      %v519 = vmul.f32 %v517, %v518
      %520 = vrot.lane.b32.xlu0 %v397, 112
      %v521 = vpop.permute.xlu0 %520
      %522 = vrot.lane.b32.xlu0 %v402, 112
      %v523 = vpop.permute.xlu0 %522
      %v525 = vsel %vm283, %v521, 0
      %v528 = vsel %vm283, %v523, 0
      %530 = vmatprep.subr.bf16.mxu0 0
      %531 = vmatpush1.bf16.xpose.msra.mxu0 %v528
      %532 = vmatprep.subr.bf16.mxu0 0
      %533 = vmatpush1.bf16.xpose.msra.mxu0 0
      %534 = vmatprep.subr.bf16.mxu0 0
      %535 = vmatpush1.bf16.xpose.msra.mxu0 0
      %536 = vmatprep.subr.bf16.mxu0 0
      %537 = vmatpush1.bf16.xpose.msra.mxu0 0
      %538 = vmatprep.subr.bf16.mxu0 0
      %539 = vmatpush1.bf16.xpose.msra.mxu0 0
      %540 = vmatprep.subr.bf16.mxu0 0
      %541 = vmatpush1.bf16.xpose.msra.mxu0 0
      %542 = vmatprep.subr.bf16.mxu0 0
      %543 = vmatpush1.bf16.xpose.msra.mxu0 0
      %544 = vmatprep.subr.bf16.mxu0 0
      %545 = vmatpush1.bf16.xpose.msra.mxu0 0
      %546 = vmatprep.subr.bf16.mxu0 0
      %547 = vmatpush1.bf16.xpose.msra.mxu0 0
      %548 = vmatprep.subr.bf16.mxu0 0
      %549 = vmatpush1.bf16.xpose.msra.mxu0 0
      %550 = vmatprep.subr.bf16.mxu0 0
      %551 = vmatpush1.bf16.xpose.msra.mxu0 0
      %552 = vmatprep.subr.bf16.mxu0 0
      %553 = vmatpush1.bf16.xpose.msra.mxu0 0
      %554 = vmatprep.subr.bf16.mxu0 0
      %555 = vmatpush1.bf16.xpose.msra.mxu0 0
      %556 = vmatprep.subr.bf16.mxu0 0
      %557 = vmatpush1.bf16.xpose.msra.mxu0 0
      %558 = vmatprep.subr.bf16.mxu0 0
      %559 = vmatpush1.bf16.xpose.msra.mxu0 0
      %560 = vmatprep.subr.bf16.mxu0 0
      %561 = vmatpush1.bf16.xpose.msra.mxu0 0
      %562 = vmatprep.mubr.bf16.mxu0 0
      %563 = vmatmul.mubr.bf16.gmra.mrb[0].mxu0 %v525
      %v564 = vpop.f32.mrb[0].mxu0
      %v565 = vadd.f32 0.0, %v564
      %v566 = vpop.f32.mrb[0].mxu0
      %v567 = vpop.f32.mrb[0].mxu0
      %v568 = vpop.f32.mrb[0].mxu0
      %569 = vdwg.mxu0
      %v570 = vsel %vm283, %v565, -inf
      %571 = vmax.xlane.f32.xlu0 %v570
      %v572 = vpop.xlane.xlu0 %571
      %v573 = vsub.f32 -inf, %v572
      %v574 = vmul.f32 %v573, 1.442695
      %v575 = vpow.pop %v574
      %v576 = vsub.f32 %v565, %v572
      %v577 = vmul.f32 %v576, 1.442695
      %v578 = vpow.pop %v577
      %v579 = vmul.f32 %v575, 0.0
      %v580 = vsel %vm283, %v578, 0.0
      %581 = vadd.xlane.f32.xlu0 %v580
      %v582 = vpop.xlane.xlu0 %581
      %v583 = vadd.f32 %v579, %v582
      %v584 = vpack.c.bf16 %v578, %v578
      %585 = vrot.lane.b32.xlu0 %v468, 112
      %v586 = vpop.permute.xlu0 %585
      %v588 = vsel %vm283, %v584, 0
      %v591 = vsel %vm348, %v586, 0
      %593 = vmatprep.subr.bf16.mxu0 0
      %594 = vmatpush1.bf16.msra.mxu0 %v591
      %595 = vmatprep.subr.bf16.mxu0 0
      %596 = vmatpush1.bf16.msra.mxu0 0
      %597 = vmatprep.subr.bf16.mxu0 0
      %598 = vmatpush1.bf16.msra.mxu0 0
      %599 = vmatprep.subr.bf16.mxu0 0
      %600 = vmatpush1.bf16.msra.mxu0 0
      %601 = vmatprep.subr.bf16.mxu0 0
      %602 = vmatpush1.bf16.msra.mxu0 0
      %603 = vmatprep.subr.bf16.mxu0 0
      %604 = vmatpush1.bf16.msra.mxu0 0
      %605 = vmatprep.subr.bf16.mxu0 0
      %606 = vmatpush1.bf16.msra.mxu0 0
      %607 = vmatprep.subr.bf16.mxu0 0
      %608 = vmatpush1.bf16.msra.mxu0 0
      %609 = vmatprep.subr.bf16.mxu0 0
      %610 = vmatpush1.bf16.msra.mxu0 0
      %611 = vmatprep.subr.bf16.mxu0 0
      %612 = vmatpush1.bf16.msra.mxu0 0
      %613 = vmatprep.subr.bf16.mxu0 0
      %614 = vmatpush1.bf16.msra.mxu0 0
      %615 = vmatprep.subr.bf16.mxu0 0
      %616 = vmatpush1.bf16.msra.mxu0 0
      %617 = vmatprep.subr.bf16.mxu0 0
      %618 = vmatpush1.bf16.msra.mxu0 0
      %619 = vmatprep.subr.bf16.mxu0 0
      %620 = vmatpush1.bf16.msra.mxu0 0
      %621 = vmatprep.subr.bf16.mxu0 0
      %622 = vmatpush1.bf16.msra.mxu0 0
      %623 = vmatprep.subr.bf16.mxu0 0
      %624 = vmatpush1.bf16.msra.mxu0 0
      %625 = vmatprep.mubr.bf16.mxu0 0
      %626 = vmatmul.mubr.bf16.gmra.mrb[0].mxu0 %v588
      %v627 = vpop.f32.mrb[0].mxu0
      %v628 = vadd.f32 0.0, %v627
      %v629 = vpop.f32.mrb[0].mxu0
      %v630 = vpop.f32.mrb[0].mxu0
      %v631 = vpop.f32.mrb[0].mxu0
      %632 = vdwg.mxu0
      %v633 = vadd.f32 %v579, %v628
      %v634 = vrcp.pop %v583
      %v635 = vmul.f32 %v633, %v634
      %636 = vrot.lane.b32.xlu0 %v397, 104
      %v637 = vpop.permute.xlu0 %636
      %638 = vrot.lane.b32.xlu0 %v402, 104
      %v639 = vpop.permute.xlu0 %638
      %v641 = vsel %vm283, %v637, 0
      %v644 = vsel %vm283, %v639, 0
      %646 = vmatprep.subr.bf16.mxu0 0
      %647 = vmatpush1.bf16.xpose.msra.mxu0 %v644
      %648 = vmatprep.subr.bf16.mxu0 0
      %649 = vmatpush1.bf16.xpose.msra.mxu0 0
      %650 = vmatprep.subr.bf16.mxu0 0
      %651 = vmatpush1.bf16.xpose.msra.mxu0 0
      %652 = vmatprep.subr.bf16.mxu0 0
      %653 = vmatpush1.bf16.xpose.msra.mxu0 0
      %654 = vmatprep.subr.bf16.mxu0 0
      %655 = vmatpush1.bf16.xpose.msra.mxu0 0
      %656 = vmatprep.subr.bf16.mxu0 0
      %657 = vmatpush1.bf16.xpose.msra.mxu0 0
      %658 = vmatprep.subr.bf16.mxu0 0
      %659 = vmatpush1.bf16.xpose.msra.mxu0 0
      %660 = vmatprep.subr.bf16.mxu0 0
      %661 = vmatpush1.bf16.xpose.msra.mxu0 0
      %662 = vmatprep.subr.bf16.mxu0 0
      %663 = vmatpush1.bf16.xpose.msra.mxu0 0
      %664 = vmatprep.subr.bf16.mxu0 0
      %665 = vmatpush1.bf16.xpose.msra.mxu0 0
      %666 = vmatprep.subr.bf16.mxu0 0
      %667 = vmatpush1.bf16.xpose.msra.mxu0 0
      %668 = vmatprep.subr.bf16.mxu0 0
      %669 = vmatpush1.bf16.xpose.msra.mxu0 0
      %670 = vmatprep.subr.bf16.mxu0 0
      %671 = vmatpush1.bf16.xpose.msra.mxu0 0
      %672 = vmatprep.subr.bf16.mxu0 0
      %673 = vmatpush1.bf16.xpose.msra.mxu0 0
      %674 = vmatprep.subr.bf16.mxu0 0
      %675 = vmatpush1.bf16.xpose.msra.mxu0 0
      %676 = vmatprep.subr.bf16.mxu0 0
      %677 = vmatpush1.bf16.xpose.msra.mxu0 0
      %678 = vmatprep.mubr.bf16.mxu0 0
      %679 = vmatmul.mubr.bf16.gmra.mrb[0].mxu0 %v641
      %v680 = vpop.f32.mrb[0].mxu0
      %v681 = vadd.f32 0.0, %v680
      %v682 = vpop.f32.mrb[0].mxu0
      %v683 = vpop.f32.mrb[0].mxu0
      %v684 = vpop.f32.mrb[0].mxu0
      %685 = vdwg.mxu0
      %v686 = vsel %vm283, %v681, -inf
      %687 = vmax.xlane.f32.xlu0 %v686
      %v688 = vpop.xlane.xlu0 %687
      %v689 = vsub.f32 -inf, %v688
      %v690 = vmul.f32 %v689, 1.442695
      %v691 = vpow.pop %v690
      %v692 = vsub.f32 %v681, %v688
      %v693 = vmul.f32 %v692, 1.442695
      %v694 = vpow.pop %v693
      %v695 = vmul.f32 %v691, 0.0
      %v696 = vsel %vm283, %v694, 0.0
      %697 = vadd.xlane.f32.xlu0 %v696
      %v698 = vpop.xlane.xlu0 %697
      %v699 = vadd.f32 %v695, %v698
      %v700 = vpack.c.bf16 %v694, %v694
      %701 = vrot.lane.b32.xlu0 %v468, 104
      %v702 = vpop.permute.xlu0 %701
      %v704 = vsel %vm283, %v700, 0
      %v707 = vsel %vm348, %v702, 0
      %709 = vmatprep.subr.bf16.mxu0 0
      %710 = vmatpush1.bf16.msra.mxu0 %v707
      %711 = vmatprep.subr.bf16.mxu0 0
      %712 = vmatpush1.bf16.msra.mxu0 0
      %713 = vmatprep.subr.bf16.mxu0 0
      %714 = vmatpush1.bf16.msra.mxu0 0
      %715 = vmatprep.subr.bf16.mxu0 0
      %716 = vmatpush1.bf16.msra.mxu0 0
      %717 = vmatprep.subr.bf16.mxu0 0
      %718 = vmatpush1.bf16.msra.mxu0 0
      %719 = vmatprep.subr.bf16.mxu0 0
      %720 = vmatpush1.bf16.msra.mxu0 0
      %721 = vmatprep.subr.bf16.mxu0 0
      %722 = vmatpush1.bf16.msra.mxu0 0
      %723 = vmatprep.subr.bf16.mxu0 0
      %724 = vmatpush1.bf16.msra.mxu0 0
      %725 = vmatprep.subr.bf16.mxu0 0
      %726 = vmatpush1.bf16.msra.mxu0 0
      %727 = vmatprep.subr.bf16.mxu0 0
      %728 = vmatpush1.bf16.msra.mxu0 0
      %729 = vmatprep.subr.bf16.mxu0 0
      %730 = vmatpush1.bf16.msra.mxu0 0
      %731 = vmatprep.subr.bf16.mxu0 0
      %732 = vmatpush1.bf16.msra.mxu0 0
      %733 = vmatprep.subr.bf16.mxu0 0
      %734 = vmatpush1.bf16.msra.mxu0 0
      %735 = vmatprep.subr.bf16.mxu0 0
      %736 = vmatpush1.bf16.msra.mxu0 0
      %737 = vmatprep.subr.bf16.mxu0 0
      %738 = vmatpush1.bf16.msra.mxu0 0
      %739 = vmatprep.subr.bf16.mxu0 0
      %740 = vmatpush1.bf16.msra.mxu0 0
      %741 = vmatprep.mubr.bf16.mxu0 0
      %742 = vmatmul.mubr.bf16.gmra.mrb[0].mxu0 %v704
      %v743 = vpop.f32.mrb[0].mxu0
      %v744 = vadd.f32 0.0, %v743
      %v745 = vpop.f32.mrb[0].mxu0
      %v746 = vpop.f32.mrb[0].mxu0
      %v747 = vpop.f32.mrb[0].mxu0
      %748 = vdwg.mxu0
      %v749 = vadd.f32 %v695, %v744
      %v750 = vrcp.pop %v699
      %v751 = vmul.f32 %v749, %v750
      %753 = vrot.lane.b32.xlu0 %v519, 8
      %v754 = vpop.permute.xlu0 %753
      %757 = vrot.lane.b32.xlu0 %v635, 16
      %v758 = vpop.permute.xlu0 %757
      %761 = vrot.lane.b32.xlu0 %v751, 24
      %v762 = vpop.permute.xlu0 %761
      %v764 = vsel %vm283, %v394, %v754
      %vm765 = vcmask 130048
      %v766 = vsel %vm765, %v764, %v758
      %vm767 = vcmask 195584
      %v768 = vsel %vm767, %v766, %v762
      %v769 = vpack.c.bf16 %v768, %v768
      %vm770 = vcmask 257024
      %771 = vst.msk [vmem:[%s278] sm:$0xf] %vm770, %v769
      %p772 = scmp.lt.s32.totalorder %s19, 1
      %s773 = scalar_select %p772, %s19, 1
      %p774 = scmp.lt.s32.totalorder %s21, 0
      %s775 = scalar_select %p774, %s21, 0
      %p776 = scmp.lt.s32.totalorder %s20, 0
      %s777 = scalar_select %p776, %s20, 0
      %s778 = sadd.s32 %s777, %s775
      %s779 = sadd.s32 %s778, %s773
      %s780 = smul.addr %s779, 4
      %s781 = scalar_lea.vmem %s3, %s780
      // Predicated region
      $region33: #{_lambda_.8} parent=31 // pred_check
        %p782 = pneg %p141
      $region34: #{_lambda_.8} parent=31 // pred_check_branch
        %784 = sbr.rel (%p782) target = $region36
      $region35: #{_lambda_.8} parent=31 // pred_region
        _
      $region36: #{_lambda_.8} parent=31 // pred_fallthru
        _
    $region32: #{_lambda_.8} parent=5 // pred_fallthru
      _
    %p785 = scmp.le.s32.totalorder 2, %s9
    // Predicated region
    $region37: #{_lambda_.8} parent=5 // pred_check
      %p786 = pneg %p785
    $region38: #{_lambda_.8} parent=5 // pred_check_branch
      %788 = sbr.rel (%p786) target = $region40
    $region39: #{_lambda_.8} parent=5 // pred_region
      %s789 = ssub.s32 %s9, 2
      // Predicated region
      $region41: #{_lambda_.8} parent=39 // pred_check
        %p790 = pneg %p147
      $region42: #{_lambda_.8} parent=39 // pred_check_branch
        %792 = sbr.rel (%p790) target = $region44
      $region43: #{_lambda_.8} parent=39 // pred_region
        %p793 = scmp.lt.s32.totalorder %s22, 1
        %s794 = scalar_select %p793, %s22, 1
        %p795 = scmp.lt.s32.totalorder %s24, 0
        %s796 = scalar_select %p795, %s24, 0
        %p797 = scmp.lt.s32.totalorder %s23, 0
        %s798 = scalar_select %p797, %s23, 0
        %s799 = sadd.s32 %s798, %s796
        %s800 = sadd.s32 %s799, %s794
        %s801 = smul.addr %s800, 4
        %s802 = scalar_lea.vmem %s3, %s801
      $region44: #{_lambda_.8} parent=39 // pred_fallthru
        _
    $region40: #{_lambda_.8} parent=5 // pred_fallthru
      _
  $region6: #{_lambda_.8} parent=0 // loop_footer
    %s13 = sadd.s32 1, %s9
  $region7: #{_lambda_.8} parent=0 // loop_footer_branch
    %8 = sbr.rel target = $region3
  $region8: #{_lambda_.8} parent=0 // loop_exit
    _

</llo_original>
